<compile_context>
chip_gen: v5e
topology: v5e:2x2
jax: 0.10.0
libtpu: 0.0.40
codegen_flags: <defaults>
</compile_context>

<pallas_src>
import math

import jax
import jax.numpy as jnp
import numpy as np
from jax.experimental import pallas as pl
from jax.experimental.pallas import tpu as pltpu


_VMEM = pl.BlockSpec(memory_space=pltpu.MemorySpace.VMEM)


# ---------------------------------------------------------------------------
# Fused kernel: all LSTM layers (wavefronted) + Linear + Sigmoid
# ---------------------------------------------------------------------------
def _fused_lstm_kernel(x_ref, wih0_ref, wcomb_ref, ball_ref, h0_ref, c0_ref,
                       wlin_ref, blin_ref, out_ref):
    """Ref layout (all whole-array VMEM):
      x_ref     (seq*batch, in_feat)   time-major, row t*batch + b
      wih0_ref  (in_feat, L*4H)        layer-0 W_ih^T padded into lane block 0
      wcomb_ref (L*H, L*4H)            block matrix: diag = W_hh_l^T,
                                       block (l-1,l) = W_ih_l^T  (l >= 1)
      ball_ref  (1, L*4H)              concatenated biases (b_ih + b_hh)
      h0_ref    (batch, L*H)           initial hidden, layer-major lanes
      c0_ref    (L, batch, H)          initial cell states
      wlin_ref  (H, l_win), blin_ref (1, l_win)
      out_ref   (batch, l_win)
    All g-gate (cell-candidate) weight/bias entries are pre-scaled by 2 so
    that tanh(pre_act) == 2*sigmoid(scaled_pre_act) - 1.
    """
    L, batch, H = c0_ref.shape
    seq = x_ref.shape[0] // batch
    G = 4 * H

    b_all = ball_ref[...]                                     # (1, L*4H)

    # Hoisted layer-0 input projection for the whole sequence (bias folded in)
    # — one matmul, completely off the serial recurrence path.
    gates_in0 = jnp.dot(x_ref[...], wih0_ref[...],
                        preferred_element_type=jnp.float32) + b_all

    w_comb = wcomb_ref[...]                                   # load once
    h_all = h0_ref[...]                                       # (batch, L*H)
    h_list = [h_all[:, l * H:(l + 1) * H] for l in range(L)]
    c_list = [c0_ref[l] for l in range(L)]

    # Wavefront: step s processes layer l at time t = s - l.  All layers
    # active in a step are independent (they read the start-of-step h_all),
    # so their work fills each other's idle MXU/EUP/VPU slots.
    for s in range(seq + L - 1):                              # static unroll
        if s < seq:
            g_base = gates_in0[s * batch:(s + 1) * batch, :]  # static slice
        else:
            g_base = b_all        # layer-0 lanes are inactive & discarded
        # One fused (batch, L*H) @ (L*H, L*4H) MXU pass: every layer's
        # recurrent term AND every layer>=1's input projection.
        gates = g_base + jnp.dot(h_all, w_comb,
                                 preferred_element_type=jnp.float32)
        sig = jax.nn.sigmoid(gates)           # single EUP pass over all gates
        for l in range(L):
            t = s - l
            if t < 0 or t >= seq:             # statically-known inactivity
                continue
            base = l * G
            i = sig[:, base + 0 * H: base + 1 * H]            # input gate
            f = sig[:, base + 1 * H: base + 2 * H]            # forget gate
            g = 2.0 * sig[:, base + 2 * H: base + 3 * H] - 1.0  # == tanh
            o = sig[:, base + 3 * H: base + 4 * H]            # output gate
            c_list[l] = f * c_list[l] + i * g
            h_list[l] = o * jnp.tanh(c_list[l])
        h_all = jnp.concatenate(h_list, axis=1) if L > 1 else h_list[0]

    # Linear head + sigmoid on the last layer's final hidden state.
    z = jnp.dot(h_list[L - 1], wlin_ref[...],
                preferred_element_type=jnp.float32) + blin_ref[...]
    out_ref[...] = jax.nn.sigmoid(z)
    # TODO(synk): for seq >> 32 or H >= 128, replace the static unroll with a
    # seq-chunked grid axis ("arbitrary") + VMEM h/c carry and set
    # pltpu.CompilerParams(vmem_limit_bytes=...); add a parallel batch axis
    # (batch >= 16) to use v7x's second TensorCore; optionally cast operands
    # to bf16 with f32 accumulation.


# ---------------------------------------------------------------------------
# Wrapper: pack PyTorch-layout weights into the fused layout and call the
# kernel.  Packing is a handful of tiny one-time XLA ops outside the kernel.
# ---------------------------------------------------------------------------
def lstm_model_forward(params, input_data, hx):
    """input_data: (batch, seq, n_features);  hx = (h0, c0), each (L, batch, H)."""
    h0, c0 = hx
    batch, seq, feat = input_data.shape
    L, _, H = h0.shape
    G = 4 * H
    l_win = params['linear']['w'].shape[0]
    f32 = jnp.float32

    def scale_g(w):   # pre-scale g-gate rows by 2 (tanh = 2*sigmoid(2x) - 1)
        return w.at[2 * H:3 * H].multiply(2.0)

    # Layer-0 input projection matrix, padded to the fused L*4H lane width.
    w_ih0_pad = jnp.zeros((feat, L * G), f32)
    w_ih0_pad = w_ih0_pad.at[:, 0:G].set(scale_g(params['lstm'][0]['w_ih']).T)

    # Block matrix: diag blocks = W_hh_l^T, super-diag blocks = W_ih_l^T.
    w_comb = jnp.zeros((L * H, L * G), f32)
    b_blocks = []
    for l in range(L):
        p = params['lstm'][l]
        w_comb = w_comb.at[l * H:(l + 1) * H,
                           l * G:(l + 1) * G].set(scale_g(p['w_hh']).T)
        if l >= 1:
            w_comb = w_comb.at[(l - 1) * H:l * H,
                               l * G:(l + 1) * G].set(scale_g(p['w_ih']).T)
        b_blocks.append(scale_g((p['b_ih'] + p['b_hh'])[:, None])[:, 0])
    b_all = jnp.concatenate(b_blocks).reshape(1, L * G)

    # Time-major flatten: row t*batch + b holds timestep t.
    x_flat = jnp.transpose(input_data, (1, 0, 2)).reshape(seq * batch, feat)
    h0_all = jnp.transpose(h0, (1, 0, 2)).reshape(batch, L * H)

    w_lin_t = params['linear']['w'].T                       # (H, l_win)
    b_lin = params['linear']['b'].reshape(1, l_win)

    args = [x_flat, w_ih0_pad, w_comb, b_all, h0_all, c0, w_lin_t, b_lin]
    return pl.pallas_call(
        _fused_lstm_kernel,
        out_shape=jax.ShapeDtypeStruct((batch, l_win), jnp.float32),
        in_specs=[_VMEM] * len(args),
        out_specs=_VMEM,
    )(*args)
    # TODO(synk): nn.LSTM inter-layer dropout (p=0.2) is train-only; eval
    # forward has none, so it is intentionally omitted.  Final (h_n, c_n) of
    # all layers are not returned (the module only consumes h[-1]).


# ---------------------------------------------------------------------------
# Parameters (raw PyTorch nn.LSTM / nn.Linear layout)
# ---------------------------------------------------------------------------
def init_params(key, config):
    n_feat = config['n_features']
    H = config['hidden_size']
    L = config['num_layers']
    l_win = config['l_win']
    k = 1.0 / math.sqrt(H)

    params = {'lstm': [], 'linear': {}}
    for layer in range(L):
        in_dim = n_feat if layer == 0 else H
        key, k1, k2, k3, k4 = jax.random.split(key, 5)
        params['lstm'].append({
            'w_ih': jax.random.uniform(k1, (4 * H, in_dim), jnp.float32, -k, k),
            'w_hh': jax.random.uniform(k2, (4 * H, H), jnp.float32, -k, k),
            'b_ih': jax.random.uniform(k3, (4 * H,), jnp.float32, -k, k),
            'b_hh': jax.random.uniform(k4, (4 * H,), jnp.float32, -k, k),
        })
    key, k1, k2 = jax.random.split(key, 3)
    params['linear'] = {
        'w': jax.random.uniform(k1, (l_win, H), jnp.float32, -k, k),
        'b': jax.random.uniform(k2, (l_win,), jnp.float32, -k, k),
    }
    return params


# ---------------------------------------------------------------------------
# Pure-JAX reference (mirrors PyTorch eval-mode forward) for validation
# ---------------------------------------------------------------------------
def lstm_model_reference(params, input_data, hx):
    h0, c0 = hx
    L, _, H = h0.shape
    batch, seq, _ = input_data.shape
    x = jnp.transpose(input_data, (1, 0, 2))                # (seq, batch, feat)
    h = None
    for layer in range(L):
        p = params['lstm'][layer]
        w_ih_t = p['w_ih'].T
        w_hh_t = p['w_hh'].T
        b = (p['b_ih'] + p['b_hh']).reshape(1, 4 * H)
        h = h0[layer]
        c = c0[layer]
        outs = []
        for t in range(seq):
            gates = x[t] @ w_ih_t + h @ w_hh_t + b
            i = jax.nn.sigmoid(gates[:, 0 * H:1 * H])
            f = jax.nn.sigmoid(gates[:, 1 * H:2 * H])
            g = jnp.tanh(gates[:, 2 * H:3 * H])
            o = jax.nn.sigmoid(gates[:, 3 * H:4 * H])
            c = f * c + i * g
            h = o * jnp.tanh(c)
            outs.append(h)
        x = jnp.stack(outs, axis=0)
    z = h @ params['linear']['w'].T + params['linear']['b'].reshape(1, -1)
    return jax.nn.sigmoid(z)


# ---------------------------------------------------------------------------
# Main
# ---------------------------------------------------------------------------
if __name__ == "__main__":
    config = {
        'n_features': 16,
        'hidden_size': 32,
        'num_layers': 2,
        'batch_size': 8,
        'l_win': 16,
    }
    seq_len = 8

    key = jax.random.PRNGKey(0)
    key, kp, kx, kh, kc = jax.random.split(key, 5)

    params = init_params(kp, config)

    input_data = jax.random.normal(
        kx, (config['batch_size'], seq_len, config['n_features']), jnp.float32)
    # Non-zero initial states to exercise the fused recurrent path as well
    # (the module's init_hidden() zeros are a special case of this).
    h0 = 0.1 * jax.random.normal(
        kh, (config['num_layers'], config['batch_size'],
             config['hidden_size']), jnp.float32)
    c0 = 0.1 * jax.random.normal(kc, h0.shape, jnp.float32)

    fwd = jax.jit(lstm_model_forward)
    out = fwd(params, input_data, (h0, c0))
    out = jax.block_until_ready(out)

    ref = lstm_model_reference(params, input_data, (h0, c0))

    assert out.shape == (config['batch_size'], config['l_win'])
    assert bool(jnp.all(jnp.isfinite(out)))
    assert bool(jnp.all((out >= 0.0) & (out <= 1.0)))
    np.testing.assert_allclose(np.asarray(out), np.asarray(ref),
                               rtol=1e-4, atol=1e-4)
    print("KERNEL_OK")
</pallas_src>

<mosaic_0001>
module attributes {stable_mosaic.version = 11 : i64} {
  func.func @_fused_lstm_kernel(%arg0: memref<64x16xf32, #tpu.memory_space<vmem>>, %arg1: memref<16x256xf32, #tpu.memory_space<vmem>>, %arg2: memref<64x256xf32, #tpu.memory_space<vmem>>, %arg3: memref<1x256xf32, #tpu.memory_space<vmem>>, %arg4: memref<8x64xf32, #tpu.memory_space<vmem>>, %arg5: memref<2x8x32xf32, #tpu.memory_space<vmem>>, %arg6: memref<32x16xf32, #tpu.memory_space<vmem>>, %arg7: memref<1x16xf32, #tpu.memory_space<vmem>>, %arg8: memref<8x16xf32, #tpu.memory_space<vmem>>) attributes {dimension_semantics = [], scalar_prefetch = 0 : i64, scratch_operands = 0 : i64, tpu.core_type = #tpu.core_type<tc>} {
    %c0 = arith.constant 0 : index
    %c0_0 = arith.constant 0 : index
    %0 = vector.load %arg3[%c0, %c0_0] : memref<1x256xf32, #tpu.memory_space<vmem>>, vector<1x256xf32>
    %c0_1 = arith.constant 0 : index
    %c0_2 = arith.constant 0 : index
    %1 = vector.load %arg0[%c0_1, %c0_2] : memref<64x16xf32, #tpu.memory_space<vmem>>, vector<64x16xf32>
    %c0_3 = arith.constant 0 : index
    %c0_4 = arith.constant 0 : index
    %2 = vector.load %arg1[%c0_3, %c0_4] : memref<16x256xf32, #tpu.memory_space<vmem>>, vector<16x256xf32>
    %cst = arith.constant dense<0.000000e+00> : vector<64x256xf32>
    %3 = tpu.matmul %1, %2, %cst {dimension_numbers = #tpu.dot_dimension_numbers<[1], [0], [0], [1], [0, 0, 1, 1], [], []>} : vector<64x16xf32>, vector<16x256xf32>, vector<64x256xf32> -> vector<64x256xf32>
    %4 = vector.broadcast %0 : vector<1x256xf32> to vector<64x256xf32>
    %5 = arith.addf %3, %4 : vector<64x256xf32>
    %c0_5 = arith.constant 0 : index
    %c0_6 = arith.constant 0 : index
    %6 = vector.load %arg2[%c0_5, %c0_6] : memref<64x256xf32, #tpu.memory_space<vmem>>, vector<64x256xf32>
    %c0_7 = arith.constant 0 : index
    %c0_8 = arith.constant 0 : index
    %7 = vector.load %arg4[%c0_7, %c0_8] : memref<8x64xf32, #tpu.memory_space<vmem>>, vector<8x64xf32>
    %8 = vector.extract_strided_slice %7 {offsets = [0, 32], sizes = [8, 32], strides = [1, 1]} : vector<8x64xf32> to vector<8x32xf32>
    %c0_9 = arith.constant 0 : index
    %c0_10 = arith.constant 0 : index
    %c0_11 = arith.constant 0 : index
    %9 = vector.load %arg5[%c0_9, %c0_10, %c0_11] : memref<2x8x32xf32, #tpu.memory_space<vmem>>, vector<1x8x32xf32>
    %10 = vector.shape_cast %9 : vector<1x8x32xf32> to vector<8x32xf32>
    %c1 = arith.constant 1 : index
    %c0_12 = arith.constant 0 : index
    %c0_13 = arith.constant 0 : index
    %11 = vector.load %arg5[%c1, %c0_12, %c0_13] : memref<2x8x32xf32, #tpu.memory_space<vmem>>, vector<1x8x32xf32>
    %12 = vector.shape_cast %11 : vector<1x8x32xf32> to vector<8x32xf32>
    %13 = vector.extract_strided_slice %5 {offsets = [0, 0], sizes = [8, 256], strides = [1, 1]} : vector<64x256xf32> to vector<8x256xf32>
    %cst_14 = arith.constant dense<0.000000e+00> : vector<8x256xf32>
    %14 = tpu.matmul %7, %6, %cst_14 {dimension_numbers = #tpu.dot_dimension_numbers<[1], [0], [0], [1], [0, 0, 1, 1], [], []>} : vector<8x64xf32>, vector<64x256xf32>, vector<8x256xf32> -> vector<8x256xf32>
    %15 = arith.addf %13, %14 : vector<8x256xf32>
    %16 = arith.negf %15 : vector<8x256xf32>
    %17 = math.exp %16 : vector<8x256xf32>
    %cst_15 = arith.constant 1.000000e+00 : f32
    %18 = vector.broadcast %cst_15 : f32 to vector<8x256xf32>
    %19 = arith.addf %18, %17 : vector<8x256xf32>
    %20 = arith.divf %18, %19 : vector<8x256xf32>
    %21 = vector.extract_strided_slice %20 {offsets = [0, 0], sizes = [8, 32], strides = [1, 1]} : vector<8x256xf32> to vector<8x32xf32>
    %22 = vector.extract_strided_slice %20 {offsets = [0, 32], sizes = [8, 32], strides = [1, 1]} : vector<8x256xf32> to vector<8x32xf32>
    %23 = vector.extract_strided_slice %20 {offsets = [0, 64], sizes = [8, 32], strides = [1, 1]} : vector<8x256xf32> to vector<8x32xf32>
    %cst_16 = arith.constant 2.000000e+00 : f32
    %24 = vector.broadcast %cst_16 : f32 to vector<8x32xf32>
    %25 = arith.mulf %24, %23 : vector<8x32xf32>
    %cst_17 = arith.constant 1.000000e+00 : f32
    %26 = vector.broadcast %cst_17 : f32 to vector<8x32xf32>
    %27 = arith.subf %25, %26 : vector<8x32xf32>
    %28 = vector.extract_strided_slice %20 {offsets = [0, 96], sizes = [8, 32], strides = [1, 1]} : vector<8x256xf32> to vector<8x32xf32>
    %29 = arith.mulf %22, %10 : vector<8x32xf32>
    %30 = arith.mulf %21, %27 : vector<8x32xf32>
    %31 = arith.addf %29, %30 : vector<8x32xf32>
    %32 = math.tanh %31 : vector<8x32xf32>
    %33 = arith.mulf %28, %32 : vector<8x32xf32>
    %34 = tpu.concatenate %33, %8 in 1 : vector<8x32xf32>, vector<8x32xf32> -> vector<8x64xf32>
    %35 = vector.extract_strided_slice %5 {offsets = [8, 0], sizes = [8, 256], strides = [1, 1]} : vector<64x256xf32> to vector<8x256xf32>
    %cst_18 = arith.constant dense<0.000000e+00> : vector<8x256xf32>
    %36 = tpu.matmul %34, %6, %cst_18 {dimension_numbers = #tpu.dot_dimension_numbers<[1], [0], [0], [1], [0, 0, 1, 1], [], []>} : vector<8x64xf32>, vector<64x256xf32>, vector<8x256xf32> -> vector<8x256xf32>
    %37 = arith.addf %35, %36 : vector<8x256xf32>
    %38 = arith.negf %37 : vector<8x256xf32>
    %39 = math.exp %38 : vector<8x256xf32>
    %cst_19 = arith.constant 1.000000e+00 : f32
    %40 = vector.broadcast %cst_19 : f32 to vector<8x256xf32>
    %41 = arith.addf %40, %39 : vector<8x256xf32>
    %42 = arith.divf %40, %41 : vector<8x256xf32>
    %43 = vector.extract_strided_slice %42 {offsets = [0, 0], sizes = [8, 32], strides = [1, 1]} : vector<8x256xf32> to vector<8x32xf32>
    %44 = vector.extract_strided_slice %42 {offsets = [0, 32], sizes = [8, 32], strides = [1, 1]} : vector<8x256xf32> to vector<8x32xf32>
    %45 = vector.extract_strided_slice %42 {offsets = [0, 64], sizes = [8, 32], strides = [1, 1]} : vector<8x256xf32> to vector<8x32xf32>
    %cst_20 = arith.constant 2.000000e+00 : f32
    %46 = vector.broadcast %cst_20 : f32 to vector<8x32xf32>
    %47 = arith.mulf %46, %45 : vector<8x32xf32>
    %cst_21 = arith.constant 1.000000e+00 : f32
    %48 = vector.broadcast %cst_21 : f32 to vector<8x32xf32>
    %49 = arith.subf %47, %48 : vector<8x32xf32>
    %50 = vector.extract_strided_slice %42 {offsets = [0, 96], sizes = [8, 32], strides = [1, 1]} : vector<8x256xf32> to vector<8x32xf32>
    %51 = arith.mulf %44, %31 : vector<8x32xf32>
    %52 = arith.mulf %43, %49 : vector<8x32xf32>
    %53 = arith.addf %51, %52 : vector<8x32xf32>
    %54 = math.tanh %53 : vector<8x32xf32>
    %55 = arith.mulf %50, %54 : vector<8x32xf32>
    %56 = vector.extract_strided_slice %42 {offsets = [0, 128], sizes = [8, 32], strides = [1, 1]} : vector<8x256xf32> to vector<8x32xf32>
    %57 = vector.extract_strided_slice %42 {offsets = [0, 160], sizes = [8, 32], strides = [1, 1]} : vector<8x256xf32> to vector<8x32xf32>
    %58 = vector.extract_strided_slice %42 {offsets = [0, 192], sizes = [8, 32], strides = [1, 1]} : vector<8x256xf32> to vector<8x32xf32>
    %cst_22 = arith.constant 2.000000e+00 : f32
    %59 = vector.broadcast %cst_22 : f32 to vector<8x32xf32>
    %60 = arith.mulf %59, %58 : vector<8x32xf32>
    %cst_23 = arith.constant 1.000000e+00 : f32
    %61 = vector.broadcast %cst_23 : f32 to vector<8x32xf32>
    %62 = arith.subf %60, %61 : vector<8x32xf32>
    %63 = vector.extract_strided_slice %42 {offsets = [0, 224], sizes = [8, 32], strides = [1, 1]} : vector<8x256xf32> to vector<8x32xf32>
    %64 = arith.mulf %57, %12 : vector<8x32xf32>
    %65 = arith.mulf %56, %62 : vector<8x32xf32>
    %66 = arith.addf %64, %65 : vector<8x32xf32>
    %67 = math.tanh %66 : vector<8x32xf32>
    %68 = arith.mulf %63, %67 : vector<8x32xf32>
    %69 = tpu.concatenate %55, %68 in 1 : vector<8x32xf32>, vector<8x32xf32> -> vector<8x64xf32>
    %70 = vector.extract_strided_slice %5 {offsets = [16, 0], sizes = [8, 256], strides = [1, 1]} : vector<64x256xf32> to vector<8x256xf32>
    %cst_24 = arith.constant dense<0.000000e+00> : vector<8x256xf32>
    %71 = tpu.matmul %69, %6, %cst_24 {dimension_numbers = #tpu.dot_dimension_numbers<[1], [0], [0], [1], [0, 0, 1, 1], [], []>} : vector<8x64xf32>, vector<64x256xf32>, vector<8x256xf32> -> vector<8x256xf32>
    %72 = arith.addf %70, %71 : vector<8x256xf32>
    %73 = arith.negf %72 : vector<8x256xf32>
    %74 = math.exp %73 : vector<8x256xf32>
    %cst_25 = arith.constant 1.000000e+00 : f32
    %75 = vector.broadcast %cst_25 : f32 to vector<8x256xf32>
    %76 = arith.addf %75, %74 : vector<8x256xf32>
    %77 = arith.divf %75, %76 : vector<8x256xf32>
    %78 = vector.extract_strided_slice %77 {offsets = [0, 0], sizes = [8, 32], strides = [1, 1]} : vector<8x256xf32> to vector<8x32xf32>
    %79 = vector.extract_strided_slice %77 {offsets = [0, 32], sizes = [8, 32], strides = [1, 1]} : vector<8x256xf32> to vector<8x32xf32>
    %80 = vector.extract_strided_slice %77 {offsets = [0, 64], sizes = [8, 32], strides = [1, 1]} : vector<8x256xf32> to vector<8x32xf32>
    %cst_26 = arith.constant 2.000000e+00 : f32
    %81 = vector.broadcast %cst_26 : f32 to vector<8x32xf32>
    %82 = arith.mulf %81, %80 : vector<8x32xf32>
    %cst_27 = arith.constant 1.000000e+00 : f32
    %83 = vector.broadcast %cst_27 : f32 to vector<8x32xf32>
    %84 = arith.subf %82, %83 : vector<8x32xf32>
    %85 = vector.extract_strided_slice %77 {offsets = [0, 96], sizes = [8, 32], strides = [1, 1]} : vector<8x256xf32> to vector<8x32xf32>
    %86 = arith.mulf %79, %53 : vector<8x32xf32>
    %87 = arith.mulf %78, %84 : vector<8x32xf32>
    %88 = arith.addf %86, %87 : vector<8x32xf32>
    %89 = math.tanh %88 : vector<8x32xf32>
    %90 = arith.mulf %85, %89 : vector<8x32xf32>
    %91 = vector.extract_strided_slice %77 {offsets = [0, 128], sizes = [8, 32], strides = [1, 1]} : vector<8x256xf32> to vector<8x32xf32>
    %92 = vector.extract_strided_slice %77 {offsets = [0, 160], sizes = [8, 32], strides = [1, 1]} : vector<8x256xf32> to vector<8x32xf32>
    %93 = vector.extract_strided_slice %77 {offsets = [0, 192], sizes = [8, 32], strides = [1, 1]} : vector<8x256xf32> to vector<8x32xf32>
    %cst_28 = arith.constant 2.000000e+00 : f32
    %94 = vector.broadcast %cst_28 : f32 to vector<8x32xf32>
    %95 = arith.mulf %94, %93 : vector<8x32xf32>
    %cst_29 = arith.constant 1.000000e+00 : f32
    %96 = vector.broadcast %cst_29 : f32 to vector<8x32xf32>
    %97 = arith.subf %95, %96 : vector<8x32xf32>
    %98 = vector.extract_strided_slice %77 {offsets = [0, 224], sizes = [8, 32], strides = [1, 1]} : vector<8x256xf32> to vector<8x32xf32>
    %99 = arith.mulf %92, %66 : vector<8x32xf32>
    %100 = arith.mulf %91, %97 : vector<8x32xf32>
    %101 = arith.addf %99, %100 : vector<8x32xf32>
    %102 = math.tanh %101 : vector<8x32xf32>
    %103 = arith.mulf %98, %102 : vector<8x32xf32>
    %104 = tpu.concatenate %90, %103 in 1 : vector<8x32xf32>, vector<8x32xf32> -> vector<8x64xf32>
    %105 = vector.extract_strided_slice %5 {offsets = [24, 0], sizes = [8, 256], strides = [1, 1]} : vector<64x256xf32> to vector<8x256xf32>
    %cst_30 = arith.constant dense<0.000000e+00> : vector<8x256xf32>
    %106 = tpu.matmul %104, %6, %cst_30 {dimension_numbers = #tpu.dot_dimension_numbers<[1], [0], [0], [1], [0, 0, 1, 1], [], []>} : vector<8x64xf32>, vector<64x256xf32>, vector<8x256xf32> -> vector<8x256xf32>
    %107 = arith.addf %105, %106 : vector<8x256xf32>
    %108 = arith.negf %107 : vector<8x256xf32>
    %109 = math.exp %108 : vector<8x256xf32>
    %cst_31 = arith.constant 1.000000e+00 : f32
    %110 = vector.broadcast %cst_31 : f32 to vector<8x256xf32>
    %111 = arith.addf %110, %109 : vector<8x256xf32>
    %112 = arith.divf %110, %111 : vector<8x256xf32>
    %113 = vector.extract_strided_slice %112 {offsets = [0, 0], sizes = [8, 32], strides = [1, 1]} : vector<8x256xf32> to vector<8x32xf32>
    %114 = vector.extract_strided_slice %112 {offsets = [0, 32], sizes = [8, 32], strides = [1, 1]} : vector<8x256xf32> to vector<8x32xf32>
    %115 = vector.extract_strided_slice %112 {offsets = [0, 64], sizes = [8, 32], strides = [1, 1]} : vector<8x256xf32> to vector<8x32xf32>
    %cst_32 = arith.constant 2.000000e+00 : f32
    %116 = vector.broadcast %cst_32 : f32 to vector<8x32xf32>
    %117 = arith.mulf %116, %115 : vector<8x32xf32>
    %cst_33 = arith.constant 1.000000e+00 : f32
    %118 = vector.broadcast %cst_33 : f32 to vector<8x32xf32>
    %119 = arith.subf %117, %118 : vector<8x32xf32>
    %120 = vector.extract_strided_slice %112 {offsets = [0, 96], sizes = [8, 32], strides = [1, 1]} : vector<8x256xf32> to vector<8x32xf32>
    %121 = arith.mulf %114, %88 : vector<8x32xf32>
    %122 = arith.mulf %113, %119 : vector<8x32xf32>
    %123 = arith.addf %121, %122 : vector<8x32xf32>
    %124 = math.tanh %123 : vector<8x32xf32>
    %125 = arith.mulf %120, %124 : vector<8x32xf32>
    %126 = vector.extract_strided_slice %112 {offsets = [0, 128], sizes = [8, 32], strides = [1, 1]} : vector<8x256xf32> to vector<8x32xf32>
    %127 = vector.extract_strided_slice %112 {offsets = [0, 160], sizes = [8, 32], strides = [1, 1]} : vector<8x256xf32> to vector<8x32xf32>
    %128 = vector.extract_strided_slice %112 {offsets = [0, 192], sizes = [8, 32], strides = [1, 1]} : vector<8x256xf32> to vector<8x32xf32>
    %cst_34 = arith.constant 2.000000e+00 : f32
    %129 = vector.broadcast %cst_34 : f32 to vector<8x32xf32>
    %130 = arith.mulf %129, %128 : vector<8x32xf32>
    %cst_35 = arith.constant 1.000000e+00 : f32
    %131 = vector.broadcast %cst_35 : f32 to vector<8x32xf32>
    %132 = arith.subf %130, %131 : vector<8x32xf32>
    %133 = vector.extract_strided_slice %112 {offsets = [0, 224], sizes = [8, 32], strides = [1, 1]} : vector<8x256xf32> to vector<8x32xf32>
    %134 = arith.mulf %127, %101 : vector<8x32xf32>
    %135 = arith.mulf %126, %132 : vector<8x32xf32>
    %136 = arith.addf %134, %135 : vector<8x32xf32>
    %137 = math.tanh %136 : vector<8x32xf32>
    %138 = arith.mulf %133, %137 : vector<8x32xf32>
    %139 = tpu.concatenate %125, %138 in 1 : vector<8x32xf32>, vector<8x32xf32> -> vector<8x64xf32>
    %140 = vector.extract_strided_slice %5 {offsets = [32, 0], sizes = [8, 256], strides = [1, 1]} : vector<64x256xf32> to vector<8x256xf32>
    %cst_36 = arith.constant dense<0.000000e+00> : vector<8x256xf32>
    %141 = tpu.matmul %139, %6, %cst_36 {dimension_numbers = #tpu.dot_dimension_numbers<[1], [0], [0], [1], [0, 0, 1, 1], [], []>} : vector<8x64xf32>, vector<64x256xf32>, vector<8x256xf32> -> vector<8x256xf32>
    %142 = arith.addf %140, %141 : vector<8x256xf32>
    %143 = arith.negf %142 : vector<8x256xf32>
    %144 = math.exp %143 : vector<8x256xf32>
    %cst_37 = arith.constant 1.000000e+00 : f32
    %145 = vector.broadcast %cst_37 : f32 to vector<8x256xf32>
    %146 = arith.addf %145, %144 : vector<8x256xf32>
    %147 = arith.divf %145, %146 : vector<8x256xf32>
    %148 = vector.extract_strided_slice %147 {offsets = [0, 0], sizes = [8, 32], strides = [1, 1]} : vector<8x256xf32> to vector<8x32xf32>
    %149 = vector.extract_strided_slice %147 {offsets = [0, 32], sizes = [8, 32], strides = [1, 1]} : vector<8x256xf32> to vector<8x32xf32>
    %150 = vector.extract_strided_slice %147 {offsets = [0, 64], sizes = [8, 32], strides = [1, 1]} : vector<8x256xf32> to vector<8x32xf32>
    %cst_38 = arith.constant 2.000000e+00 : f32
    %151 = vector.broadcast %cst_38 : f32 to vector<8x32xf32>
    %152 = arith.mulf %151, %150 : vector<8x32xf32>
    %cst_39 = arith.constant 1.000000e+00 : f32
    %153 = vector.broadcast %cst_39 : f32 to vector<8x32xf32>
    %154 = arith.subf %152, %153 : vector<8x32xf32>
    %155 = vector.extract_strided_slice %147 {offsets = [0, 96], sizes = [8, 32], strides = [1, 1]} : vector<8x256xf32> to vector<8x32xf32>
    %156 = arith.mulf %149, %123 : vector<8x32xf32>
    %157 = arith.mulf %148, %154 : vector<8x32xf32>
    %158 = arith.addf %156, %157 : vector<8x32xf32>
    %159 = math.tanh %158 : vector<8x32xf32>
    %160 = arith.mulf %155, %159 : vector<8x32xf32>
    %161 = vector.extract_strided_slice %147 {offsets = [0, 128], sizes = [8, 32], strides = [1, 1]} : vector<8x256xf32> to vector<8x32xf32>
    %162 = vector.extract_strided_slice %147 {offsets = [0, 160], sizes = [8, 32], strides = [1, 1]} : vector<8x256xf32> to vector<8x32xf32>
    %163 = vector.extract_strided_slice %147 {offsets = [0, 192], sizes = [8, 32], strides = [1, 1]} : vector<8x256xf32> to vector<8x32xf32>
    %cst_40 = arith.constant 2.000000e+00 : f32
    %164 = vector.broadcast %cst_40 : f32 to vector<8x32xf32>
    %165 = arith.mulf %164, %163 : vector<8x32xf32>
    %cst_41 = arith.constant 1.000000e+00 : f32
    %166 = vector.broadcast %cst_41 : f32 to vector<8x32xf32>
    %167 = arith.subf %165, %166 : vector<8x32xf32>
    %168 = vector.extract_strided_slice %147 {offsets = [0, 224], sizes = [8, 32], strides = [1, 1]} : vector<8x256xf32> to vector<8x32xf32>
    %169 = arith.mulf %162, %136 : vector<8x32xf32>
    %170 = arith.mulf %161, %167 : vector<8x32xf32>
    %171 = arith.addf %169, %170 : vector<8x32xf32>
    %172 = math.tanh %171 : vector<8x32xf32>
    %173 = arith.mulf %168, %172 : vector<8x32xf32>
    %174 = tpu.concatenate %160, %173 in 1 : vector<8x32xf32>, vector<8x32xf32> -> vector<8x64xf32>
    %175 = vector.extract_strided_slice %5 {offsets = [40, 0], sizes = [8, 256], strides = [1, 1]} : vector<64x256xf32> to vector<8x256xf32>
    %cst_42 = arith.constant dense<0.000000e+00> : vector<8x256xf32>
    %176 = tpu.matmul %174, %6, %cst_42 {dimension_numbers = #tpu.dot_dimension_numbers<[1], [0], [0], [1], [0, 0, 1, 1], [], []>} : vector<8x64xf32>, vector<64x256xf32>, vector<8x256xf32> -> vector<8x256xf32>
    %177 = arith.addf %175, %176 : vector<8x256xf32>
    %178 = arith.negf %177 : vector<8x256xf32>
    %179 = math.exp %178 : vector<8x256xf32>
    %cst_43 = arith.constant 1.000000e+00 : f32
    %180 = vector.broadcast %cst_43 : f32 to vector<8x256xf32>
    %181 = arith.addf %180, %179 : vector<8x256xf32>
    %182 = arith.divf %180, %181 : vector<8x256xf32>
    %183 = vector.extract_strided_slice %182 {offsets = [0, 0], sizes = [8, 32], strides = [1, 1]} : vector<8x256xf32> to vector<8x32xf32>
    %184 = vector.extract_strided_slice %182 {offsets = [0, 32], sizes = [8, 32], strides = [1, 1]} : vector<8x256xf32> to vector<8x32xf32>
    %185 = vector.extract_strided_slice %182 {offsets = [0, 64], sizes = [8, 32], strides = [1, 1]} : vector<8x256xf32> to vector<8x32xf32>
    %cst_44 = arith.constant 2.000000e+00 : f32
    %186 = vector.broadcast %cst_44 : f32 to vector<8x32xf32>
    %187 = arith.mulf %186, %185 : vector<8x32xf32>
    %cst_45 = arith.constant 1.000000e+00 : f32
    %188 = vector.broadcast %cst_45 : f32 to vector<8x32xf32>
    %189 = arith.subf %187, %188 : vector<8x32xf32>
    %190 = vector.extract_strided_slice %182 {offsets = [0, 96], sizes = [8, 32], strides = [1, 1]} : vector<8x256xf32> to vector<8x32xf32>
    %191 = arith.mulf %184, %158 : vector<8x32xf32>
    %192 = arith.mulf %183, %189 : vector<8x32xf32>
    %193 = arith.addf %191, %192 : vector<8x32xf32>
    %194 = math.tanh %193 : vector<8x32xf32>
    %195 = arith.mulf %190, %194 : vector<8x32xf32>
    %196 = vector.extract_strided_slice %182 {offsets = [0, 128], sizes = [8, 32], strides = [1, 1]} : vector<8x256xf32> to vector<8x32xf32>
    %197 = vector.extract_strided_slice %182 {offsets = [0, 160], sizes = [8, 32], strides = [1, 1]} : vector<8x256xf32> to vector<8x32xf32>
    %198 = vector.extract_strided_slice %182 {offsets = [0, 192], sizes = [8, 32], strides = [1, 1]} : vector<8x256xf32> to vector<8x32xf32>
    %cst_46 = arith.constant 2.000000e+00 : f32
    %199 = vector.broadcast %cst_46 : f32 to vector<8x32xf32>
    %200 = arith.mulf %199, %198 : vector<8x32xf32>
    %cst_47 = arith.constant 1.000000e+00 : f32
    %201 = vector.broadcast %cst_47 : f32 to vector<8x32xf32>
    %202 = arith.subf %200, %201 : vector<8x32xf32>
    %203 = vector.extract_strided_slice %182 {offsets = [0, 224], sizes = [8, 32], strides = [1, 1]} : vector<8x256xf32> to vector<8x32xf32>
    %204 = arith.mulf %197, %171 : vector<8x32xf32>
    %205 = arith.mulf %196, %202 : vector<8x32xf32>
    %206 = arith.addf %204, %205 : vector<8x32xf32>
    %207 = math.tanh %206 : vector<8x32xf32>
    %208 = arith.mulf %203, %207 : vector<8x32xf32>
    %209 = tpu.concatenate %195, %208 in 1 : vector<8x32xf32>, vector<8x32xf32> -> vector<8x64xf32>
    %210 = vector.extract_strided_slice %5 {offsets = [48, 0], sizes = [8, 256], strides = [1, 1]} : vector<64x256xf32> to vector<8x256xf32>
    %cst_48 = arith.constant dense<0.000000e+00> : vector<8x256xf32>
    %211 = tpu.matmul %209, %6, %cst_48 {dimension_numbers = #tpu.dot_dimension_numbers<[1], [0], [0], [1], [0, 0, 1, 1], [], []>} : vector<8x64xf32>, vector<64x256xf32>, vector<8x256xf32> -> vector<8x256xf32>
    %212 = arith.addf %210, %211 : vector<8x256xf32>
    %213 = arith.negf %212 : vector<8x256xf32>
    %214 = math.exp %213 : vector<8x256xf32>
    %cst_49 = arith.constant 1.000000e+00 : f32
    %215 = vector.broadcast %cst_49 : f32 to vector<8x256xf32>
    %216 = arith.addf %215, %214 : vector<8x256xf32>
    %217 = arith.divf %215, %216 : vector<8x256xf32>
    %218 = vector.extract_strided_slice %217 {offsets = [0, 0], sizes = [8, 32], strides = [1, 1]} : vector<8x256xf32> to vector<8x32xf32>
    %219 = vector.extract_strided_slice %217 {offsets = [0, 32], sizes = [8, 32], strides = [1, 1]} : vector<8x256xf32> to vector<8x32xf32>
    %220 = vector.extract_strided_slice %217 {offsets = [0, 64], sizes = [8, 32], strides = [1, 1]} : vector<8x256xf32> to vector<8x32xf32>
    %cst_50 = arith.constant 2.000000e+00 : f32
    %221 = vector.broadcast %cst_50 : f32 to vector<8x32xf32>
    %222 = arith.mulf %221, %220 : vector<8x32xf32>
    %cst_51 = arith.constant 1.000000e+00 : f32
    %223 = vector.broadcast %cst_51 : f32 to vector<8x32xf32>
    %224 = arith.subf %222, %223 : vector<8x32xf32>
    %225 = vector.extract_strided_slice %217 {offsets = [0, 96], sizes = [8, 32], strides = [1, 1]} : vector<8x256xf32> to vector<8x32xf32>
    %226 = arith.mulf %219, %193 : vector<8x32xf32>
    %227 = arith.mulf %218, %224 : vector<8x32xf32>
    %228 = arith.addf %226, %227 : vector<8x32xf32>
    %229 = math.tanh %228 : vector<8x32xf32>
    %230 = arith.mulf %225, %229 : vector<8x32xf32>
    %231 = vector.extract_strided_slice %217 {offsets = [0, 128], sizes = [8, 32], strides = [1, 1]} : vector<8x256xf32> to vector<8x32xf32>
    %232 = vector.extract_strided_slice %217 {offsets = [0, 160], sizes = [8, 32], strides = [1, 1]} : vector<8x256xf32> to vector<8x32xf32>
    %233 = vector.extract_strided_slice %217 {offsets = [0, 192], sizes = [8, 32], strides = [1, 1]} : vector<8x256xf32> to vector<8x32xf32>
    %cst_52 = arith.constant 2.000000e+00 : f32
    %234 = vector.broadcast %cst_52 : f32 to vector<8x32xf32>
    %235 = arith.mulf %234, %233 : vector<8x32xf32>
    %cst_53 = arith.constant 1.000000e+00 : f32
    %236 = vector.broadcast %cst_53 : f32 to vector<8x32xf32>
    %237 = arith.subf %235, %236 : vector<8x32xf32>
    %238 = vector.extract_strided_slice %217 {offsets = [0, 224], sizes = [8, 32], strides = [1, 1]} : vector<8x256xf32> to vector<8x32xf32>
    %239 = arith.mulf %232, %206 : vector<8x32xf32>
    %240 = arith.mulf %231, %237 : vector<8x32xf32>
    %241 = arith.addf %239, %240 : vector<8x32xf32>
    %242 = math.tanh %241 : vector<8x32xf32>
    %243 = arith.mulf %238, %242 : vector<8x32xf32>
    %244 = tpu.concatenate %230, %243 in 1 : vector<8x32xf32>, vector<8x32xf32> -> vector<8x64xf32>
    %245 = vector.extract_strided_slice %5 {offsets = [56, 0], sizes = [8, 256], strides = [1, 1]} : vector<64x256xf32> to vector<8x256xf32>
    %cst_54 = arith.constant dense<0.000000e+00> : vector<8x256xf32>
    %246 = tpu.matmul %244, %6, %cst_54 {dimension_numbers = #tpu.dot_dimension_numbers<[1], [0], [0], [1], [0, 0, 1, 1], [], []>} : vector<8x64xf32>, vector<64x256xf32>, vector<8x256xf32> -> vector<8x256xf32>
    %247 = arith.addf %245, %246 : vector<8x256xf32>
    %248 = arith.negf %247 : vector<8x256xf32>
    %249 = math.exp %248 : vector<8x256xf32>
    %cst_55 = arith.constant 1.000000e+00 : f32
    %250 = vector.broadcast %cst_55 : f32 to vector<8x256xf32>
    %251 = arith.addf %250, %249 : vector<8x256xf32>
    %252 = arith.divf %250, %251 : vector<8x256xf32>
    %253 = vector.extract_strided_slice %252 {offsets = [0, 0], sizes = [8, 32], strides = [1, 1]} : vector<8x256xf32> to vector<8x32xf32>
    %254 = vector.extract_strided_slice %252 {offsets = [0, 32], sizes = [8, 32], strides = [1, 1]} : vector<8x256xf32> to vector<8x32xf32>
    %255 = vector.extract_strided_slice %252 {offsets = [0, 64], sizes = [8, 32], strides = [1, 1]} : vector<8x256xf32> to vector<8x32xf32>
    %cst_56 = arith.constant 2.000000e+00 : f32
    %256 = vector.broadcast %cst_56 : f32 to vector<8x32xf32>
    %257 = arith.mulf %256, %255 : vector<8x32xf32>
    %cst_57 = arith.constant 1.000000e+00 : f32
    %258 = vector.broadcast %cst_57 : f32 to vector<8x32xf32>
    %259 = arith.subf %257, %258 : vector<8x32xf32>
    %260 = vector.extract_strided_slice %252 {offsets = [0, 96], sizes = [8, 32], strides = [1, 1]} : vector<8x256xf32> to vector<8x32xf32>
    %261 = arith.mulf %254, %228 : vector<8x32xf32>
    %262 = arith.mulf %253, %259 : vector<8x32xf32>
    %263 = arith.addf %261, %262 : vector<8x32xf32>
    %264 = math.tanh %263 : vector<8x32xf32>
    %265 = arith.mulf %260, %264 : vector<8x32xf32>
    %266 = vector.extract_strided_slice %252 {offsets = [0, 128], sizes = [8, 32], strides = [1, 1]} : vector<8x256xf32> to vector<8x32xf32>
    %267 = vector.extract_strided_slice %252 {offsets = [0, 160], sizes = [8, 32], strides = [1, 1]} : vector<8x256xf32> to vector<8x32xf32>
    %268 = vector.extract_strided_slice %252 {offsets = [0, 192], sizes = [8, 32], strides = [1, 1]} : vector<8x256xf32> to vector<8x32xf32>
    %cst_58 = arith.constant 2.000000e+00 : f32
    %269 = vector.broadcast %cst_58 : f32 to vector<8x32xf32>
    %270 = arith.mulf %269, %268 : vector<8x32xf32>
    %cst_59 = arith.constant 1.000000e+00 : f32
    %271 = vector.broadcast %cst_59 : f32 to vector<8x32xf32>
    %272 = arith.subf %270, %271 : vector<8x32xf32>
    %273 = vector.extract_strided_slice %252 {offsets = [0, 224], sizes = [8, 32], strides = [1, 1]} : vector<8x256xf32> to vector<8x32xf32>
    %274 = arith.mulf %267, %241 : vector<8x32xf32>
    %275 = arith.mulf %266, %272 : vector<8x32xf32>
    %276 = arith.addf %274, %275 : vector<8x32xf32>
    %277 = math.tanh %276 : vector<8x32xf32>
    %278 = arith.mulf %273, %277 : vector<8x32xf32>
    %279 = tpu.concatenate %265, %278 in 1 : vector<8x32xf32>, vector<8x32xf32> -> vector<8x64xf32>
    %cst_60 = arith.constant dense<0.000000e+00> : vector<8x256xf32>
    %280 = tpu.matmul %279, %6, %cst_60 {dimension_numbers = #tpu.dot_dimension_numbers<[1], [0], [0], [1], [0, 0, 1, 1], [], []>} : vector<8x64xf32>, vector<64x256xf32>, vector<8x256xf32> -> vector<8x256xf32>
    %281 = vector.broadcast %0 : vector<1x256xf32> to vector<8x256xf32>
    %282 = arith.addf %281, %280 : vector<8x256xf32>
    %283 = arith.negf %282 : vector<8x256xf32>
    %284 = math.exp %283 : vector<8x256xf32>
    %cst_61 = arith.constant 1.000000e+00 : f32
    %285 = vector.broadcast %cst_61 : f32 to vector<8x256xf32>
    %286 = arith.addf %285, %284 : vector<8x256xf32>
    %287 = arith.divf %285, %286 : vector<8x256xf32>
    %288 = vector.extract_strided_slice %287 {offsets = [0, 128], sizes = [8, 32], strides = [1, 1]} : vector<8x256xf32> to vector<8x32xf32>
    %289 = vector.extract_strided_slice %287 {offsets = [0, 160], sizes = [8, 32], strides = [1, 1]} : vector<8x256xf32> to vector<8x32xf32>
    %290 = vector.extract_strided_slice %287 {offsets = [0, 192], sizes = [8, 32], strides = [1, 1]} : vector<8x256xf32> to vector<8x32xf32>
    %cst_62 = arith.constant 2.000000e+00 : f32
    %291 = vector.broadcast %cst_62 : f32 to vector<8x32xf32>
    %292 = arith.mulf %291, %290 : vector<8x32xf32>
    %cst_63 = arith.constant 1.000000e+00 : f32
    %293 = vector.broadcast %cst_63 : f32 to vector<8x32xf32>
    %294 = arith.subf %292, %293 : vector<8x32xf32>
    %295 = vector.extract_strided_slice %287 {offsets = [0, 224], sizes = [8, 32], strides = [1, 1]} : vector<8x256xf32> to vector<8x32xf32>
    %296 = arith.mulf %289, %276 : vector<8x32xf32>
    %297 = arith.mulf %288, %294 : vector<8x32xf32>
    %298 = arith.addf %296, %297 : vector<8x32xf32>
    %299 = math.tanh %298 : vector<8x32xf32>
    %300 = arith.mulf %295, %299 : vector<8x32xf32>
    %c0_64 = arith.constant 0 : index
    %c0_65 = arith.constant 0 : index
    %301 = vector.load %arg6[%c0_64, %c0_65] : memref<32x16xf32, #tpu.memory_space<vmem>>, vector<32x16xf32>
    %cst_66 = arith.constant dense<0.000000e+00> : vector<8x16xf32>
    %302 = tpu.matmul %300, %301, %cst_66 {dimension_numbers = #tpu.dot_dimension_numbers<[1], [0], [0], [1], [0, 0, 1, 1], [], []>} : vector<8x32xf32>, vector<32x16xf32>, vector<8x16xf32> -> vector<8x16xf32>
    %c0_67 = arith.constant 0 : index
    %c0_68 = arith.constant 0 : index
    %303 = vector.load %arg7[%c0_67, %c0_68] : memref<1x16xf32, #tpu.memory_space<vmem>>, vector<1x16xf32>
    %304 = vector.broadcast %303 : vector<1x16xf32> to vector<8x16xf32>
    %305 = arith.addf %302, %304 : vector<8x16xf32>
    %306 = arith.negf %305 : vector<8x16xf32>
    %307 = math.exp %306 : vector<8x16xf32>
    %cst_69 = arith.constant 1.000000e+00 : f32
    %308 = vector.broadcast %cst_69 : f32 to vector<8x16xf32>
    %309 = arith.addf %308, %307 : vector<8x16xf32>
    %310 = arith.divf %308, %309 : vector<8x16xf32>
    %c0_70 = arith.constant 0 : index
    %c0_71 = arith.constant 0 : index
    %311 = vector.load %arg8[%c0_70, %c0_71] : memref<8x16xf32, #tpu.memory_space<vmem>>, vector<8x16xf32>
    tpu.vector_store %arg8[%c0_70, %c0_71], %310 {strides = array<i32>} : memref<8x16xf32, #tpu.memory_space<vmem>>, vector<8x16xf32>,
    return
  }
}

</mosaic_0001>

<llo_original>
// kernel: lstm_model_forward.1
$region0: #{lstm_model_forward.1}
  #allocation0 [shape = 'u32[]', space=smem, size = 0x4, offset = 0x4, fixed_abs, tag = 'smem constant byte address 0x4 - core index']
  #allocation1 [shape = 'u32[72,128]{1,0:T(1,128)}', space=vmem, size = 0x9000, scoped, tag = 'internal scratch']
  %s0 = inlined_call_operand.vmem [shape: f32[64,16], index: 0, kind: input, shape index: {}]
  %s1 = inlined_call_operand.vmem [shape: f32[16,256], index: 1, kind: input, shape index: {}]
  %s2 = inlined_call_operand.vmem [shape: f32[64,256], index: 2, kind: input, shape index: {}]
  %s3 = inlined_call_operand.vmem [shape: f32[1,256], index: 3, kind: input, shape index: {}]
  %s4 = inlined_call_operand.vmem [shape: f32[8,64], index: 4, kind: input, shape index: {}]
  %s5 = inlined_call_operand.vmem [shape: f32[2,8,32], index: 5, kind: input, shape index: {}]
  %s6 = inlined_call_operand.vmem [shape: f32[32,16], index: 6, kind: input, shape index: {}]
  %s7 = inlined_call_operand.vmem [shape: f32[1,16], index: 7, kind: input, shape index: {}]
  %s8 = inlined_call_operand.hbm [shape: f32[8,16], index: 8, kind: output, shape index: {}]
  %s9 = sld [smem:[#allocation0]]
  $region42: #{lstm_model_forward.1} parent=0
    _
  %s11 = ssub.s32 1, %s9
  %s12 = scalar_select 0, %s11, %s9
  $region1: #{lstm_model_forward.1} parent=0
    #allocation2 [shape = 'u8[4096]{0}', space=vmem, size = 0x1000, scoped, tag = 'output window, operand 0, single buffered']
    #allocation3 [shape = 's32[1]{0}', space=sflag, size = 0x4, scoped, tag = 'scoped memory for lstm_model_forward.1']
    %13 = vsyncpa [#allocation3], 0
    // Predicated region
    $region2: #{lstm_model_forward.1} parent=1 // pred_check
      _
    $region3: #{lstm_model_forward.1} parent=1 // pred_check_branch
      %15 = sbr.rel (0) target = $region5
    $region4: #{lstm_model_forward.1} parent=1 // pred_region
      _
    $region5: #{lstm_model_forward.1} parent=1 // pred_fallthru
      _
    // Predicated region
    $region6: #{lstm_model_forward.1} parent=1 // pred_check
      _
    $region7: #{lstm_model_forward.1} parent=1 // pred_check_branch
      %17 = sbr.rel (0) target = $region9
    $region8: #{lstm_model_forward.1} parent=1 // pred_region
      _
    $region9: #{lstm_model_forward.1} parent=1 // pred_fallthru
      _
    // Predicated region
    $region10: #{lstm_model_forward.1} parent=1 // pred_check
      _
    $region11: #{lstm_model_forward.1} parent=1 // pred_check_branch
      %19 = sbr.rel (0) target = $region13
    $region12: #{lstm_model_forward.1} parent=1 // pred_region
      _
    $region13: #{lstm_model_forward.1} parent=1 // pred_fallthru
      _
    // Predicated region
    $region14: #{lstm_model_forward.1} parent=1 // pred_check
      _
    $region15: #{lstm_model_forward.1} parent=1 // pred_check_branch
      %21 = sbr.rel (0) target = $region17
    $region16: #{lstm_model_forward.1} parent=1 // pred_region
      _
    $region17: #{lstm_model_forward.1} parent=1 // pred_fallthru
      _
    // Predicated region
    $region18: #{lstm_model_forward.1} parent=1 // pred_check
      _
    $region19: #{lstm_model_forward.1} parent=1 // pred_check_branch
      %23 = sbr.rel (0) target = $region21
    $region20: #{lstm_model_forward.1} parent=1 // pred_region
      _
    $region21: #{lstm_model_forward.1} parent=1 // pred_fallthru
      _
    // Predicated region
    $region22: #{lstm_model_forward.1} parent=1 // pred_check
      _
    $region23: #{lstm_model_forward.1} parent=1 // pred_check_branch
      %25 = sbr.rel (0) target = $region25
    $region24: #{lstm_model_forward.1} parent=1 // pred_region
      _
    $region25: #{lstm_model_forward.1} parent=1 // pred_fallthru
      _
    // Predicated region
    $region26: #{lstm_model_forward.1} parent=1 // pred_check
      _
    $region27: #{lstm_model_forward.1} parent=1 // pred_check_branch
      %27 = sbr.rel (0) target = $region29
    $region28: #{lstm_model_forward.1} parent=1 // pred_region
      _
    $region29: #{lstm_model_forward.1} parent=1 // pred_fallthru
      _
    // Predicated region
    $region30: #{lstm_model_forward.1} parent=1 // pred_check
      _
    $region31: #{lstm_model_forward.1} parent=1 // pred_check_branch
      %29 = sbr.rel (0) target = $region33
    $region32: #{lstm_model_forward.1} parent=1 // pred_region
      _
    $region33: #{lstm_model_forward.1} parent=1 // pred_fallthru
      _
    %v30 = vld [vmem:[%s3] sm:$0x3]
    %v31 = vld [vmem:[%s0] sm:$0xff]
    %v32 = vld [vmem:[%s0 + $0x8] sm:$0xff]
    %v33 = vld [vmem:[%s0 + $0x10] sm:$0xff]
    %v34 = vld [vmem:[%s0 + $0x18] sm:$0xff]
    %v35 = vld [vmem:[%s0 + $0x20] sm:$0xff]
    %v36 = vld [vmem:[%s0 + $0x28] sm:$0xff]
    %v37 = vld [vmem:[%s0 + $0x30] sm:$0xff]
    %v38 = vld [vmem:[%s0 + $0x38] sm:$0xff]
    %v39 = vld [vmem:[%s1] sm:$0xff]
    %v40 = vld [vmem:[%s1 + $0x8] sm:$0xff]
    %v41 = vld [vmem:[%s1 + $0x10] sm:$0xff]
    %v42 = vld [vmem:[%s1 + $0x18] sm:$0xff]
    %v44 = vperm.slane %v30, 0
    %v45 = vperm.slane %v30, 1
    %vm48 = vcmask 130048
    %v50 = vsel %vm48, %v31, 0
    %v53 = vsel %vm48, %v32, 0
    %v56 = vsel %vm48, %v33, 0
    %v59 = vsel %vm48, %v34, 0
    %v62 = vsel %vm48, %v35, 0
    %v65 = vsel %vm48, %v36, 0
    %v68 = vsel %vm48, %v37, 0
    %v71 = vsel %vm48, %v38, 0
    %73 = vmatpush.msra.mxu0 0.0
    %74 = vmatpush.msra.mxu0 0.0
    %75 = vmatpush.msra.mxu0 0.0
    %76 = vmatpush.msra.mxu0 0.0
    %77 = vmatpush.msra.mxu0 0.0
    %78 = vmatpush.msra.mxu0 0.0
    %79 = vmatpush.msra.mxu0 0.0
    %80 = vmatpush.msra.mxu0 0.0
    %81 = vmatpush.msra.mxu0 0.0
    %82 = vmatpush.msra.mxu0 0.0
    %83 = vmatpush.msra.mxu0 0.0
    %84 = vmatpush.msra.mxu0 0.0
    %85 = vmatpush.msra.mxu0 0.0
    %86 = vmatpush.msra.mxu0 0.0
    %87 = vmatpush.msra.mxu0 %v41
    %88 = vmatpush.msra.mxu0 %v39
    %89 = vmatmul.f32.gmra.mxu0 %v50
    %v90 = vpop.f32.mrf.mxu0
    %v91 = vadd.f32 %v44, %v90
    %92 = vmatmul.f32.gmra.mxu0 %v53
    %v93 = vpop.f32.mrf.mxu0
    %v94 = vadd.f32 %v44, %v93
    %95 = vmatmul.f32.gmra.mxu0 %v56
    %v96 = vpop.f32.mrf.mxu0
    %v97 = vadd.f32 %v44, %v96
    %98 = vmatmul.f32.gmra.mxu0 %v59
    %v99 = vpop.f32.mrf.mxu0
    %v100 = vadd.f32 %v44, %v99
    %101 = vmatmul.f32.gmra.mxu0 %v62
    %v102 = vpop.f32.mrf.mxu0
    %v103 = vadd.f32 %v44, %v102
    %104 = vmatmul.f32.gmra.mxu0 %v65
    %v105 = vpop.f32.mrf.mxu0
    %v106 = vadd.f32 %v44, %v105
    %107 = vmatmul.f32.gmra.mxu0 %v68
    %v108 = vpop.f32.mrf.mxu0
    %v109 = vadd.f32 %v44, %v108
    %110 = vmatmul.f32.gmra.mxu0 %v71
    %v111 = vpop.f32.mrf.mxu0
    %v112 = vadd.f32 %v44, %v111
    %113 = vdwg.mxu0
    %114 = vmatpush.msra.mxu0 0.0
    %115 = vmatpush.msra.mxu0 0.0
    %116 = vmatpush.msra.mxu0 0.0
    %117 = vmatpush.msra.mxu0 0.0
    %118 = vmatpush.msra.mxu0 0.0
    %119 = vmatpush.msra.mxu0 0.0
    %120 = vmatpush.msra.mxu0 0.0
    %121 = vmatpush.msra.mxu0 0.0
    %122 = vmatpush.msra.mxu0 0.0
    %123 = vmatpush.msra.mxu0 0.0
    %124 = vmatpush.msra.mxu0 0.0
    %125 = vmatpush.msra.mxu0 0.0
    %126 = vmatpush.msra.mxu0 0.0
    %127 = vmatpush.msra.mxu0 0.0
    %128 = vmatpush.msra.mxu0 %v42
    %129 = vmatpush.msra.mxu0 %v40
    %130 = vmatmul.f32.gmra.mxu0 %v50
    %v131 = vpop.f32.mrf.mxu0
    %132 = vmatmul.f32.gmra.mxu0 %v53
    %v133 = vpop.f32.mrf.mxu0
    %v134 = vadd.f32 %v45, %v133
    %135 = vmatmul.f32.gmra.mxu0 %v56
    %v136 = vpop.f32.mrf.mxu0
    %v137 = vadd.f32 %v45, %v136
    %138 = vmatmul.f32.gmra.mxu0 %v59
    %v139 = vpop.f32.mrf.mxu0
    %v140 = vadd.f32 %v45, %v139
    %141 = vmatmul.f32.gmra.mxu0 %v62
    %v142 = vpop.f32.mrf.mxu0
    %v143 = vadd.f32 %v45, %v142
    %144 = vmatmul.f32.gmra.mxu0 %v65
    %v145 = vpop.f32.mrf.mxu0
    %v146 = vadd.f32 %v45, %v145
    %147 = vmatmul.f32.gmra.mxu0 %v68
    %v148 = vpop.f32.mrf.mxu0
    %v149 = vadd.f32 %v45, %v148
    %150 = vmatmul.f32.gmra.mxu0 %v71
    %v151 = vpop.f32.mrf.mxu0
    %v152 = vadd.f32 %v45, %v151
    %153 = vdwg.mxu0
    %v154 = vld [vmem:[%s2] sm:$0xff]
    %v155 = vld [vmem:[%s2 + $0x8] sm:$0xff]
    %v156 = vld [vmem:[%s2 + $0x10] sm:$0xff]
    %v157 = vld [vmem:[%s2 + $0x18] sm:$0xff]
    %v158 = vld [vmem:[%s2 + $0x20] sm:$0xff]
    %v159 = vld [vmem:[%s2 + $0x28] sm:$0xff]
    %v160 = vld [vmem:[%s2 + $0x30] sm:$0xff]
    %v161 = vld [vmem:[%s2 + $0x38] sm:$0xff]
    %v162 = vld [vmem:[%s2 + $0x40] sm:$0xff]
    %v163 = vld [vmem:[%s2 + $0x48] sm:$0xff]
    %v164 = vld [vmem:[%s2 + $0x50] sm:$0xff]
    %v165 = vld [vmem:[%s2 + $0x58] sm:$0xff]
    %v166 = vld [vmem:[%s2 + $0x60] sm:$0xff]
    %v167 = vld [vmem:[%s2 + $0x68] sm:$0xff]
    %v168 = vld [vmem:[%s2 + $0x70] sm:$0xff]
    %v169 = vld [vmem:[%s2 + $0x78] sm:$0xff]
    %v170 = vld [vmem:[%s4] sm:$0xff]
    %v171 = vld [vmem:[%s5] sm:$0xff]
    %s172 = scalar_lea.vmem %s5, 8
    %v173 = vld [vmem:[%s172] sm:$0xff]
    %vm174 = vcmask 523264
    %v176 = vsel %vm174, %v170, 0
    %178 = vmatpush.msra.mxu0 0.0
    %179 = vmatpush.msra.mxu0 0.0
    %180 = vmatpush.msra.mxu0 0.0
    %181 = vmatpush.msra.mxu0 0.0
    %182 = vmatpush.msra.mxu0 0.0
    %183 = vmatpush.msra.mxu0 0.0
    %184 = vmatpush.msra.mxu0 0.0
    %185 = vmatpush.msra.mxu0 0.0
    %186 = vmatpush.msra.mxu0 %v168
    %187 = vmatpush.msra.mxu0 %v166
    %188 = vmatpush.msra.mxu0 %v164
    %189 = vmatpush.msra.mxu0 %v162
    %190 = vmatpush.msra.mxu0 %v160
    %191 = vmatpush.msra.mxu0 %v158
    %192 = vmatpush.msra.mxu0 %v156
    %193 = vmatpush.msra.mxu0 %v154
    %194 = vmatmul.f32.gmra.mxu0 %v176
    %v195 = vpop.f32.mrf.mxu0
    %v196 = vadd.f32 0.0, %v195
    %197 = vdwg.mxu0
    %v198 = vadd.f32 %v91, %v196
    %v199 = vxor.u32 %v198, 2147483648
    %v200 = vmul.f32 %v199, 1.442695
    %v201 = vpow.pop %v200
    %v202 = vadd.f32 %v201, 1.0
    %v203 = vrcp.pop %v202
    %v204 = vmul.f32 %v202, %v203
    %v205 = vsub.f32 1.0, %v204
    %v206 = vmul.f32 %v203, %v205
    %v207 = vadd.f32 %v203, %v206
    %vm208 = vweird.f32 %v202
    %vm209 = vweird.f32 %v203
    %vm210 = vmor %vm208, %vm209
    %v211 = vsel %vm210, %v203, %v207
    %v212 = vand.u32 2147483647, %v202
    %vm213 = vcmp.eq.f32.partialorder %v212, 8.507059e+37
    %v214 = vand.u32 %v202, 2147483648
    %v215 = vor.u32 1.1754944e-38, %v214
    %v216 = vsel %vm213, %v215, %v211
    %v217 = vmul.f32 1.0, %v216
    %v218 = vmul.f32 %v217, 2.0
    %v219 = vsub.f32 %v218, 1.0
    %221 = vrot.lane.b32.xlu0 %v171, 32
    %v222 = vpop.permute.xlu0 %221
    %v224 = vmul.f32 %v217, %v222
    %226 = vrot.lane.b32.xlu0 %v219, 64
    %v227 = vpop.permute.xlu0 %226
    %v229 = vmul.f32 %v217, %v227
    %231 = vrot.lane.b32.xlu0 %v229, 32
    %v232 = vpop.permute.xlu0 %231
    %v234 = vadd.f32 %v224, %v232
    %v235 = vtanh.pop %v234
    %237 = vrot.lane.b32.xlu0 %v235, 64
    %v238 = vpop.permute.xlu0 %237
    %v240 = vmul.f32 %v217, %v238
    %242 = vrot.lane.b32.xlu0 %v240, 32
    %v243 = vpop.permute.xlu0 %242
    %vm245 = vcmask 261120
    %v246 = vsel %vm245, %v243, %v170
    %v248 = vsel %vm174, %v246, 0
    %250 = vmatpush.msra.mxu0 0.0
    %251 = vmatpush.msra.mxu0 0.0
    %252 = vmatpush.msra.mxu0 0.0
    %253 = vmatpush.msra.mxu0 0.0
    %254 = vmatpush.msra.mxu0 0.0
    %255 = vmatpush.msra.mxu0 0.0
    %256 = vmatpush.msra.mxu0 0.0
    %257 = vmatpush.msra.mxu0 0.0
    %258 = vmatpush.msra.mxu0 %v168
    %259 = vmatpush.msra.mxu0 %v166
    %260 = vmatpush.msra.mxu0 %v164
    %261 = vmatpush.msra.mxu0 %v162
    %262 = vmatpush.msra.mxu0 %v160
    %263 = vmatpush.msra.mxu0 %v158
    %264 = vmatpush.msra.mxu0 %v156
    %265 = vmatpush.msra.mxu0 %v154
    %266 = vmatmul.f32.gmra.mxu0 %v248
    %v267 = vpop.f32.mrf.mxu0
    %v268 = vadd.f32 0.0, %v267
    %269 = vdwg.mxu0
    %270 = vmatpush.msra.mxu0 0.0
    %271 = vmatpush.msra.mxu0 0.0
    %272 = vmatpush.msra.mxu0 0.0
    %273 = vmatpush.msra.mxu0 0.0
    %274 = vmatpush.msra.mxu0 0.0
    %275 = vmatpush.msra.mxu0 0.0
    %276 = vmatpush.msra.mxu0 0.0
    %277 = vmatpush.msra.mxu0 0.0
    %278 = vmatpush.msra.mxu0 %v169
    %279 = vmatpush.msra.mxu0 %v167
    %280 = vmatpush.msra.mxu0 %v165
    %281 = vmatpush.msra.mxu0 %v163
    %282 = vmatpush.msra.mxu0 %v161
    %283 = vmatpush.msra.mxu0 %v159
    %284 = vmatpush.msra.mxu0 %v157
    %285 = vmatpush.msra.mxu0 %v155
    %286 = vmatmul.f32.gmra.mxu0 %v248
    %v287 = vpop.f32.mrf.mxu0
    %v288 = vadd.f32 0.0, %v287
    %289 = vdwg.mxu0
    %v290 = vadd.f32 %v94, %v268
    %v291 = vadd.f32 %v134, %v288
    %v292 = vxor.u32 %v290, 2147483648
    %v293 = vxor.u32 %v291, 2147483648
    %v294 = vmul.f32 %v292, 1.442695
    %v295 = vpow.pop %v294
    %v296 = vmul.f32 %v293, 1.442695
    %v297 = vpow.pop %v296
    %v298 = vadd.f32 %v295, 1.0
    %v299 = vadd.f32 %v297, 1.0
    %v300 = vrcp.pop %v298
    %v301 = vmul.f32 %v298, %v300
    %v302 = vsub.f32 1.0, %v301
    %v303 = vmul.f32 %v300, %v302
    %v304 = vadd.f32 %v300, %v303
    %vm305 = vweird.f32 %v298
    %vm306 = vweird.f32 %v300
    %vm307 = vmor %vm305, %vm306
    %v308 = vsel %vm307, %v300, %v304
    %v309 = vand.u32 2147483647, %v298
    %vm310 = vcmp.eq.f32.partialorder %v309, 8.507059e+37
    %v311 = vand.u32 %v298, 2147483648
    %v312 = vor.u32 1.1754944e-38, %v311
    %v313 = vsel %vm310, %v312, %v308
    %v314 = vmul.f32 1.0, %v313
    %v315 = vrcp.pop %v299
    %v316 = vmul.f32 %v299, %v315
    %v317 = vsub.f32 1.0, %v316
    %v318 = vmul.f32 %v315, %v317
    %v319 = vadd.f32 %v315, %v318
    %vm320 = vweird.f32 %v299
    %vm321 = vweird.f32 %v315
    %vm322 = vmor %vm320, %vm321
    %v323 = vsel %vm322, %v315, %v319
    %v324 = vand.u32 2147483647, %v299
    %vm325 = vcmp.eq.f32.partialorder %v324, 8.507059e+37
    %v326 = vand.u32 %v299, 2147483648
    %v327 = vor.u32 1.1754944e-38, %v326
    %v328 = vsel %vm325, %v327, %v323
    %v329 = vmul.f32 1.0, %v328
    %v330 = vmul.f32 %v314, 2.0
    %v331 = vsub.f32 %v330, 1.0
    %v332 = vmul.f32 %v314, %v234
    %334 = vrot.lane.b32.xlu0 %v331, 64
    %v335 = vpop.permute.xlu0 %334
    %v337 = vmul.f32 %v314, %v335
    %339 = vrot.lane.b32.xlu0 %v337, 32
    %v340 = vpop.permute.xlu0 %339
    %v342 = vadd.f32 %v332, %v340
    %v343 = vtanh.pop %v342
    %345 = vrot.lane.b32.xlu0 %v343, 64
    %v346 = vpop.permute.xlu0 %345
    %v348 = vmul.f32 %v314, %v346
    %v349 = vmul.f32 %v329, 2.0
    %v350 = vsub.f32 %v349, 1.0
    %352 = vrot.lane.b32.xlu0 %v173, 32
    %v353 = vpop.permute.xlu0 %352
    %v355 = vmul.f32 %v329, %v353
    %357 = vrot.lane.b32.xlu0 %v350, 64
    %v358 = vpop.permute.xlu0 %357
    %v360 = vmul.f32 %v329, %v358
    %362 = vrot.lane.b32.xlu0 %v360, 32
    %v363 = vpop.permute.xlu0 %362
    %v365 = vadd.f32 %v355, %v363
    %v366 = vtanh.pop %v365
    %368 = vrot.lane.b32.xlu0 %v366, 64
    %v369 = vpop.permute.xlu0 %368
    %v371 = vmul.f32 %v329, %v369
    %373 = vrot.lane.b32.xlu0 %v348, 32
    %v374 = vpop.permute.xlu0 %373
    %377 = vrot.lane.b32.xlu0 %v371, 64
    %v378 = vpop.permute.xlu0 %377
    %v380 = vsel %vm245, %v374, %v378
    %v382 = vsel %vm174, %v380, 0
    %384 = vmatpush.msra.mxu0 0.0
    %385 = vmatpush.msra.mxu0 0.0
    %386 = vmatpush.msra.mxu0 0.0
    %387 = vmatpush.msra.mxu0 0.0
    %388 = vmatpush.msra.mxu0 0.0
    %389 = vmatpush.msra.mxu0 0.0
    %390 = vmatpush.msra.mxu0 0.0
    %391 = vmatpush.msra.mxu0 0.0
    %392 = vmatpush.msra.mxu0 %v168
    %393 = vmatpush.msra.mxu0 %v166
    %394 = vmatpush.msra.mxu0 %v164
    %395 = vmatpush.msra.mxu0 %v162
    %396 = vmatpush.msra.mxu0 %v160
    %397 = vmatpush.msra.mxu0 %v158
    %398 = vmatpush.msra.mxu0 %v156
    %399 = vmatpush.msra.mxu0 %v154
    %400 = vmatmul.f32.gmra.mxu0 %v382
    %v401 = vpop.f32.mrf.mxu0
    %v402 = vadd.f32 0.0, %v401
    %403 = vdwg.mxu0
    %404 = vmatpush.msra.mxu0 0.0
    %405 = vmatpush.msra.mxu0 0.0
    %406 = vmatpush.msra.mxu0 0.0
    %407 = vmatpush.msra.mxu0 0.0
    %408 = vmatpush.msra.mxu0 0.0
    %409 = vmatpush.msra.mxu0 0.0
    %410 = vmatpush.msra.mxu0 0.0
    %411 = vmatpush.msra.mxu0 0.0
    %412 = vmatpush.msra.mxu0 %v169
    %413 = vmatpush.msra.mxu0 %v167
    %414 = vmatpush.msra.mxu0 %v165
    %415 = vmatpush.msra.mxu0 %v163
    %416 = vmatpush.msra.mxu0 %v161
    %417 = vmatpush.msra.mxu0 %v159
    %418 = vmatpush.msra.mxu0 %v157
    %419 = vmatpush.msra.mxu0 %v155
    %420 = vmatmul.f32.gmra.mxu0 %v382
    %v421 = vpop.f32.mrf.mxu0
    %v422 = vadd.f32 0.0, %v421
    %423 = vdwg.mxu0
    %v424 = vadd.f32 %v97, %v402
    %v425 = vadd.f32 %v137, %v422
    %v426 = vxor.u32 %v424, 2147483648
    %v427 = vxor.u32 %v425, 2147483648
    %v428 = vmul.f32 %v426, 1.442695
    %v429 = vpow.pop %v428
    %v430 = vmul.f32 %v427, 1.442695
    %v431 = vpow.pop %v430
    %v432 = vadd.f32 %v429, 1.0
    %v433 = vadd.f32 %v431, 1.0
    %v434 = vrcp.pop %v432
    %v435 = vmul.f32 %v432, %v434
    %v436 = vsub.f32 1.0, %v435
    %v437 = vmul.f32 %v434, %v436
    %v438 = vadd.f32 %v434, %v437
    %vm439 = vweird.f32 %v432
    %vm440 = vweird.f32 %v434
    %vm441 = vmor %vm439, %vm440
    %v442 = vsel %vm441, %v434, %v438
    %v443 = vand.u32 2147483647, %v432
    %vm444 = vcmp.eq.f32.partialorder %v443, 8.507059e+37
    %v445 = vand.u32 %v432, 2147483648
    %v446 = vor.u32 1.1754944e-38, %v445
    %v447 = vsel %vm444, %v446, %v442
    %v448 = vmul.f32 1.0, %v447
    %v449 = vrcp.pop %v433
    %v450 = vmul.f32 %v433, %v449
    %v451 = vsub.f32 1.0, %v450
    %v452 = vmul.f32 %v449, %v451
    %v453 = vadd.f32 %v449, %v452
    %vm454 = vweird.f32 %v433
    %vm455 = vweird.f32 %v449
    %vm456 = vmor %vm454, %vm455
    %v457 = vsel %vm456, %v449, %v453
    %v458 = vand.u32 2147483647, %v433
    %vm459 = vcmp.eq.f32.partialorder %v458, 8.507059e+37
    %v460 = vand.u32 %v433, 2147483648
    %v461 = vor.u32 1.1754944e-38, %v460
    %v462 = vsel %vm459, %v461, %v457
    %v463 = vmul.f32 1.0, %v462
    %v464 = vmul.f32 %v448, 2.0
    %v465 = vsub.f32 %v464, 1.0
    %v466 = vmul.f32 %v448, %v342
    %468 = vrot.lane.b32.xlu0 %v465, 64
    %v469 = vpop.permute.xlu0 %468
    %v471 = vmul.f32 %v448, %v469
    %473 = vrot.lane.b32.xlu0 %v471, 32
    %v474 = vpop.permute.xlu0 %473
    %v476 = vadd.f32 %v466, %v474
    %v477 = vtanh.pop %v476
    %479 = vrot.lane.b32.xlu0 %v477, 64
    %v480 = vpop.permute.xlu0 %479
    %v482 = vmul.f32 %v448, %v480
    %v483 = vmul.f32 %v463, 2.0
    %v484 = vsub.f32 %v483, 1.0
    %v485 = vmul.f32 %v463, %v365
    %487 = vrot.lane.b32.xlu0 %v484, 64
    %v488 = vpop.permute.xlu0 %487
    %v490 = vmul.f32 %v463, %v488
    %492 = vrot.lane.b32.xlu0 %v490, 32
    %v493 = vpop.permute.xlu0 %492
    %v495 = vadd.f32 %v485, %v493
    %v496 = vtanh.pop %v495
    %498 = vrot.lane.b32.xlu0 %v496, 64
    %v499 = vpop.permute.xlu0 %498
    %v501 = vmul.f32 %v463, %v499
    %503 = vrot.lane.b32.xlu0 %v482, 32
    %v504 = vpop.permute.xlu0 %503
    %507 = vrot.lane.b32.xlu0 %v501, 64
    %v508 = vpop.permute.xlu0 %507
    %v510 = vsel %vm245, %v504, %v508
    %v512 = vsel %vm174, %v510, 0
    %514 = vmatpush.msra.mxu0 0.0
    %515 = vmatpush.msra.mxu0 0.0
    %516 = vmatpush.msra.mxu0 0.0
    %517 = vmatpush.msra.mxu0 0.0
    %518 = vmatpush.msra.mxu0 0.0
    %519 = vmatpush.msra.mxu0 0.0
    %520 = vmatpush.msra.mxu0 0.0
    %521 = vmatpush.msra.mxu0 0.0
    %522 = vmatpush.msra.mxu0 %v168
    %523 = vmatpush.msra.mxu0 %v166
    %524 = vmatpush.msra.mxu0 %v164
    %525 = vmatpush.msra.mxu0 %v162
    %526 = vmatpush.msra.mxu0 %v160
    %527 = vmatpush.msra.mxu0 %v158
    %528 = vmatpush.msra.mxu0 %v156
    %529 = vmatpush.msra.mxu0 %v154
    %530 = vmatmul.f32.gmra.mxu0 %v512
    %v531 = vpop.f32.mrf.mxu0
    %v532 = vadd.f32 0.0, %v531
    %533 = vdwg.mxu0
    %534 = vmatpush.msra.mxu0 0.0
    %535 = vmatpush.msra.mxu0 0.0
    %536 = vmatpush.msra.mxu0 0.0
    %537 = vmatpush.msra.mxu0 0.0
    %538 = vmatpush.msra.mxu0 0.0
    %539 = vmatpush.msra.mxu0 0.0
    %540 = vmatpush.msra.mxu0 0.0
    %541 = vmatpush.msra.mxu0 0.0
    %542 = vmatpush.msra.mxu0 %v169
    %543 = vmatpush.msra.mxu0 %v167
    %544 = vmatpush.msra.mxu0 %v165
    %545 = vmatpush.msra.mxu0 %v163
    %546 = vmatpush.msra.mxu0 %v161
    %547 = vmatpush.msra.mxu0 %v159
    %548 = vmatpush.msra.mxu0 %v157
    %549 = vmatpush.msra.mxu0 %v155
    %550 = vmatmul.f32.gmra.mxu0 %v512
    %v551 = vpop.f32.mrf.mxu0
    %v552 = vadd.f32 0.0, %v551
    %553 = vdwg.mxu0
    %v554 = vadd.f32 %v100, %v532
    %v555 = vadd.f32 %v140, %v552
    %v556 = vxor.u32 %v554, 2147483648
    %v557 = vxor.u32 %v555, 2147483648
    %v558 = vmul.f32 %v556, 1.442695
    %v559 = vpow.pop %v558
    %v560 = vmul.f32 %v557, 1.442695
    %v561 = vpow.pop %v560
    %v562 = vadd.f32 %v559, 1.0
    %v563 = vadd.f32 %v561, 1.0
    %v564 = vrcp.pop %v562
    %v565 = vmul.f32 %v562, %v564
    %v566 = vsub.f32 1.0, %v565
    %v567 = vmul.f32 %v564, %v566
    %v568 = vadd.f32 %v564, %v567
    %vm569 = vweird.f32 %v562
    %vm570 = vweird.f32 %v564
    %vm571 = vmor %vm569, %vm570
    %v572 = vsel %vm571, %v564, %v568
    %v573 = vand.u32 2147483647, %v562
    %vm574 = vcmp.eq.f32.partialorder %v573, 8.507059e+37
    %v575 = vand.u32 %v562, 2147483648
    %v576 = vor.u32 1.1754944e-38, %v575
    %v577 = vsel %vm574, %v576, %v572
    %v578 = vmul.f32 1.0, %v577
    %v579 = vrcp.pop %v563
    %v580 = vmul.f32 %v563, %v579
    %v581 = vsub.f32 1.0, %v580
    %v582 = vmul.f32 %v579, %v581
    %v583 = vadd.f32 %v579, %v582
    %vm584 = vweird.f32 %v563
    %vm585 = vweird.f32 %v579
    %vm586 = vmor %vm584, %vm585
    %v587 = vsel %vm586, %v579, %v583
    %v588 = vand.u32 2147483647, %v563
    %vm589 = vcmp.eq.f32.partialorder %v588, 8.507059e+37
    %v590 = vand.u32 %v563, 2147483648
    %v591 = vor.u32 1.1754944e-38, %v590
    %v592 = vsel %vm589, %v591, %v587
    %v593 = vmul.f32 1.0, %v592
    %v594 = vmul.f32 %v578, 2.0
    %v595 = vsub.f32 %v594, 1.0
    %v596 = vmul.f32 %v578, %v476
    %598 = vrot.lane.b32.xlu0 %v595, 64
    %v599 = vpop.permute.xlu0 %598
    %v601 = vmul.f32 %v578, %v599
    %603 = vrot.lane.b32.xlu0 %v601, 32
    %v604 = vpop.permute.xlu0 %603
    %v606 = vadd.f32 %v596, %v604
    %v607 = vtanh.pop %v606
    %609 = vrot.lane.b32.xlu0 %v607, 64
    %v610 = vpop.permute.xlu0 %609
    %v612 = vmul.f32 %v578, %v610
    %v613 = vmul.f32 %v593, 2.0
    %v614 = vsub.f32 %v613, 1.0
    %v615 = vmul.f32 %v593, %v495
    %617 = vrot.lane.b32.xlu0 %v614, 64
    %v618 = vpop.permute.xlu0 %617
    %v620 = vmul.f32 %v593, %v618
    %622 = vrot.lane.b32.xlu0 %v620, 32
    %v623 = vpop.permute.xlu0 %622
    %v625 = vadd.f32 %v615, %v623
    %v626 = vtanh.pop %v625
    %628 = vrot.lane.b32.xlu0 %v626, 64
    %v629 = vpop.permute.xlu0 %628
    %v631 = vmul.f32 %v593, %v629
    %633 = vrot.lane.b32.xlu0 %v612, 32
    %v634 = vpop.permute.xlu0 %633
    %637 = vrot.lane.b32.xlu0 %v631, 64
    %v638 = vpop.permute.xlu0 %637
    %v640 = vsel %vm245, %v634, %v638
    %v642 = vsel %vm174, %v640, 0
    %644 = vmatpush.msra.mxu0 0.0
    %645 = vmatpush.msra.mxu0 0.0
    %646 = vmatpush.msra.mxu0 0.0
    %647 = vmatpush.msra.mxu0 0.0
    %648 = vmatpush.msra.mxu0 0.0
    %649 = vmatpush.msra.mxu0 0.0
    %650 = vmatpush.msra.mxu0 0.0
    %651 = vmatpush.msra.mxu0 0.0
    %652 = vmatpush.msra.mxu0 %v168
    %653 = vmatpush.msra.mxu0 %v166
    %654 = vmatpush.msra.mxu0 %v164
    %655 = vmatpush.msra.mxu0 %v162
    %656 = vmatpush.msra.mxu0 %v160
    %657 = vmatpush.msra.mxu0 %v158
    %658 = vmatpush.msra.mxu0 %v156
    %659 = vmatpush.msra.mxu0 %v154
    %660 = vmatmul.f32.gmra.mxu0 %v642
    %v661 = vpop.f32.mrf.mxu0
    %v662 = vadd.f32 0.0, %v661
    %663 = vdwg.mxu0
    %664 = vmatpush.msra.mxu0 0.0
    %665 = vmatpush.msra.mxu0 0.0
    %666 = vmatpush.msra.mxu0 0.0
    %667 = vmatpush.msra.mxu0 0.0
    %668 = vmatpush.msra.mxu0 0.0
    %669 = vmatpush.msra.mxu0 0.0
    %670 = vmatpush.msra.mxu0 0.0
    %671 = vmatpush.msra.mxu0 0.0
    %672 = vmatpush.msra.mxu0 %v169
    %673 = vmatpush.msra.mxu0 %v167
    %674 = vmatpush.msra.mxu0 %v165
    %675 = vmatpush.msra.mxu0 %v163
    %676 = vmatpush.msra.mxu0 %v161
    %677 = vmatpush.msra.mxu0 %v159
    %678 = vmatpush.msra.mxu0 %v157
    %679 = vmatpush.msra.mxu0 %v155
    %680 = vmatmul.f32.gmra.mxu0 %v642
    %v681 = vpop.f32.mrf.mxu0
    %v682 = vadd.f32 0.0, %v681
    %683 = vdwg.mxu0
    %v684 = vadd.f32 %v103, %v662
    %v685 = vadd.f32 %v143, %v682
    %v686 = vxor.u32 %v684, 2147483648
    %v687 = vxor.u32 %v685, 2147483648
    %v688 = vmul.f32 %v686, 1.442695
    %v689 = vpow.pop %v688
    %v690 = vmul.f32 %v687, 1.442695
    %v691 = vpow.pop %v690
    %v692 = vadd.f32 %v689, 1.0
    %v693 = vadd.f32 %v691, 1.0
    %v694 = vrcp.pop %v692
    %v695 = vmul.f32 %v692, %v694
    %v696 = vsub.f32 1.0, %v695
    %v697 = vmul.f32 %v694, %v696
    %v698 = vadd.f32 %v694, %v697
    %vm699 = vweird.f32 %v692
    %vm700 = vweird.f32 %v694
    %vm701 = vmor %vm699, %vm700
    %v702 = vsel %vm701, %v694, %v698
    %v703 = vand.u32 2147483647, %v692
    %vm704 = vcmp.eq.f32.partialorder %v703, 8.507059e+37
    %v705 = vand.u32 %v692, 2147483648
    %v706 = vor.u32 1.1754944e-38, %v705
    %v707 = vsel %vm704, %v706, %v702
    %v708 = vmul.f32 1.0, %v707
    %v709 = vrcp.pop %v693
    %v710 = vmul.f32 %v693, %v709
    %v711 = vsub.f32 1.0, %v710
    %v712 = vmul.f32 %v709, %v711
    %v713 = vadd.f32 %v709, %v712
    %vm714 = vweird.f32 %v693
    %vm715 = vweird.f32 %v709
    %vm716 = vmor %vm714, %vm715
    %v717 = vsel %vm716, %v709, %v713
    %v718 = vand.u32 2147483647, %v693
    %vm719 = vcmp.eq.f32.partialorder %v718, 8.507059e+37
    %v720 = vand.u32 %v693, 2147483648
    %v721 = vor.u32 1.1754944e-38, %v720
    %v722 = vsel %vm719, %v721, %v717
    %v723 = vmul.f32 1.0, %v722
    %v724 = vmul.f32 %v708, 2.0
    %v725 = vsub.f32 %v724, 1.0
    %v726 = vmul.f32 %v708, %v606
    %728 = vrot.lane.b32.xlu0 %v725, 64
    %v729 = vpop.permute.xlu0 %728
    %v731 = vmul.f32 %v708, %v729
    %733 = vrot.lane.b32.xlu0 %v731, 32
    %v734 = vpop.permute.xlu0 %733
    %v736 = vadd.f32 %v726, %v734
    %v737 = vtanh.pop %v736
    %739 = vrot.lane.b32.xlu0 %v737, 64
    %v740 = vpop.permute.xlu0 %739
    %v742 = vmul.f32 %v708, %v740
    %v743 = vmul.f32 %v723, 2.0
    %v744 = vsub.f32 %v743, 1.0
    %v745 = vmul.f32 %v723, %v625
    %747 = vrot.lane.b32.xlu0 %v744, 64
    %v748 = vpop.permute.xlu0 %747
    %v750 = vmul.f32 %v723, %v748
    %752 = vrot.lane.b32.xlu0 %v750, 32
    %v753 = vpop.permute.xlu0 %752
    %v755 = vadd.f32 %v745, %v753
    %v756 = vtanh.pop %v755
    %758 = vrot.lane.b32.xlu0 %v756, 64
    %v759 = vpop.permute.xlu0 %758
    %v761 = vmul.f32 %v723, %v759
    %763 = vrot.lane.b32.xlu0 %v742, 32
    %v764 = vpop.permute.xlu0 %763
    %767 = vrot.lane.b32.xlu0 %v761, 64
    %v768 = vpop.permute.xlu0 %767
    %v770 = vsel %vm245, %v764, %v768
    %v772 = vsel %vm174, %v770, 0
    %774 = vmatpush.msra.mxu0 0.0
    %775 = vmatpush.msra.mxu0 0.0
    %776 = vmatpush.msra.mxu0 0.0
    %777 = vmatpush.msra.mxu0 0.0
    %778 = vmatpush.msra.mxu0 0.0
    %779 = vmatpush.msra.mxu0 0.0
    %780 = vmatpush.msra.mxu0 0.0
    %781 = vmatpush.msra.mxu0 0.0
    %782 = vmatpush.msra.mxu0 %v168
    %783 = vmatpush.msra.mxu0 %v166
    %784 = vmatpush.msra.mxu0 %v164
    %785 = vmatpush.msra.mxu0 %v162
    %786 = vmatpush.msra.mxu0 %v160
    %787 = vmatpush.msra.mxu0 %v158
    %788 = vmatpush.msra.mxu0 %v156
    %789 = vmatpush.msra.mxu0 %v154
    %790 = vmatmul.f32.gmra.mxu0 %v772
    %v791 = vpop.f32.mrf.mxu0
    %v792 = vadd.f32 0.0, %v791
    %793 = vdwg.mxu0
    %794 = vmatpush.msra.mxu0 0.0
    %795 = vmatpush.msra.mxu0 0.0
    %796 = vmatpush.msra.mxu0 0.0
    %797 = vmatpush.msra.mxu0 0.0
    %798 = vmatpush.msra.mxu0 0.0
    %799 = vmatpush.msra.mxu0 0.0
    %800 = vmatpush.msra.mxu0 0.0
    %801 = vmatpush.msra.mxu0 0.0
    %802 = vmatpush.msra.mxu0 %v169
    %803 = vmatpush.msra.mxu0 %v167
    %804 = vmatpush.msra.mxu0 %v165
    %805 = vmatpush.msra.mxu0 %v163
    %806 = vmatpush.msra.mxu0 %v161
    %807 = vmatpush.msra.mxu0 %v159
    %808 = vmatpush.msra.mxu0 %v157
    %809 = vmatpush.msra.mxu0 %v155
    %810 = vmatmul.f32.gmra.mxu0 %v772
    %v811 = vpop.f32.mrf.mxu0
    %v812 = vadd.f32 0.0, %v811
    %813 = vdwg.mxu0
    %v814 = vadd.f32 %v106, %v792
    %v815 = vadd.f32 %v146, %v812
    %v816 = vxor.u32 %v814, 2147483648
    %v817 = vxor.u32 %v815, 2147483648
    %v818 = vmul.f32 %v816, 1.442695
    %v819 = vpow.pop %v818
    %v820 = vmul.f32 %v817, 1.442695
    %v821 = vpow.pop %v820
    %v822 = vadd.f32 %v819, 1.0
    %v823 = vadd.f32 %v821, 1.0
    %v824 = vrcp.pop %v822
    %v825 = vmul.f32 %v822, %v824
    %v826 = vsub.f32 1.0, %v825
    %v827 = vmul.f32 %v824, %v826
    %v828 = vadd.f32 %v824, %v827
    %vm829 = vweird.f32 %v822
    %vm830 = vweird.f32 %v824
    %vm831 = vmor %vm829, %vm830
    %v832 = vsel %vm831, %v824, %v828
    %v833 = vand.u32 2147483647, %v822
    %vm834 = vcmp.eq.f32.partialorder %v833, 8.507059e+37
    %v835 = vand.u32 %v822, 2147483648
    %v836 = vor.u32 1.1754944e-38, %v835
    %v837 = vsel %vm834, %v836, %v832
    %v838 = vmul.f32 1.0, %v837
    %v839 = vrcp.pop %v823
    %v840 = vmul.f32 %v823, %v839
    %v841 = vsub.f32 1.0, %v840
    %v842 = vmul.f32 %v839, %v841
    %v843 = vadd.f32 %v839, %v842
    %vm844 = vweird.f32 %v823
    %vm845 = vweird.f32 %v839
    %vm846 = vmor %vm844, %vm845
    %v847 = vsel %vm846, %v839, %v843
    %v848 = vand.u32 2147483647, %v823
    %vm849 = vcmp.eq.f32.partialorder %v848, 8.507059e+37
    %v850 = vand.u32 %v823, 2147483648
    %v851 = vor.u32 1.1754944e-38, %v850
    %v852 = vsel %vm849, %v851, %v847
    %v853 = vmul.f32 1.0, %v852
    %v854 = vmul.f32 %v838, 2.0
    %v855 = vsub.f32 %v854, 1.0
    %v856 = vmul.f32 %v838, %v736
    %858 = vrot.lane.b32.xlu0 %v855, 64
    %v859 = vpop.permute.xlu0 %858
    %v861 = vmul.f32 %v838, %v859
    %863 = vrot.lane.b32.xlu0 %v861, 32
    %v864 = vpop.permute.xlu0 %863
    %v866 = vadd.f32 %v856, %v864
    %v867 = vtanh.pop %v866
    %869 = vrot.lane.b32.xlu0 %v867, 64
    %v870 = vpop.permute.xlu0 %869
    %v872 = vmul.f32 %v838, %v870
    %v873 = vmul.f32 %v853, 2.0
    %v874 = vsub.f32 %v873, 1.0
    %v875 = vmul.f32 %v853, %v755
    %877 = vrot.lane.b32.xlu0 %v874, 64
    %v878 = vpop.permute.xlu0 %877
    %v880 = vmul.f32 %v853, %v878
    %882 = vrot.lane.b32.xlu0 %v880, 32
    %v883 = vpop.permute.xlu0 %882
    %v885 = vadd.f32 %v875, %v883
    %v886 = vtanh.pop %v885
    %888 = vrot.lane.b32.xlu0 %v886, 64
    %v889 = vpop.permute.xlu0 %888
    %v891 = vmul.f32 %v853, %v889
    %893 = vrot.lane.b32.xlu0 %v872, 32
    %v894 = vpop.permute.xlu0 %893
    %897 = vrot.lane.b32.xlu0 %v891, 64
    %v898 = vpop.permute.xlu0 %897
    %v900 = vsel %vm245, %v894, %v898
    %v902 = vsel %vm174, %v900, 0
    %904 = vmatpush.msra.mxu0 0.0
    %905 = vmatpush.msra.mxu0 0.0
    %906 = vmatpush.msra.mxu0 0.0
    %907 = vmatpush.msra.mxu0 0.0
    %908 = vmatpush.msra.mxu0 0.0
    %909 = vmatpush.msra.mxu0 0.0
    %910 = vmatpush.msra.mxu0 0.0
    %911 = vmatpush.msra.mxu0 0.0
    %912 = vmatpush.msra.mxu0 %v168
    %913 = vmatpush.msra.mxu0 %v166
    %914 = vmatpush.msra.mxu0 %v164
    %915 = vmatpush.msra.mxu0 %v162
    %916 = vmatpush.msra.mxu0 %v160
    %917 = vmatpush.msra.mxu0 %v158
    %918 = vmatpush.msra.mxu0 %v156
    %919 = vmatpush.msra.mxu0 %v154
    %920 = vmatmul.f32.gmra.mxu0 %v902
    %v921 = vpop.f32.mrf.mxu0
    %v922 = vadd.f32 0.0, %v921
    %923 = vdwg.mxu0
    %924 = vmatpush.msra.mxu0 0.0
    %925 = vmatpush.msra.mxu0 0.0
    %926 = vmatpush.msra.mxu0 0.0
    %927 = vmatpush.msra.mxu0 0.0
    %928 = vmatpush.msra.mxu0 0.0
    %929 = vmatpush.msra.mxu0 0.0
    %930 = vmatpush.msra.mxu0 0.0
    %931 = vmatpush.msra.mxu0 0.0
    %932 = vmatpush.msra.mxu0 %v169
    %933 = vmatpush.msra.mxu0 %v167
    %934 = vmatpush.msra.mxu0 %v165
    %935 = vmatpush.msra.mxu0 %v163
    %936 = vmatpush.msra.mxu0 %v161
    %937 = vmatpush.msra.mxu0 %v159
    %938 = vmatpush.msra.mxu0 %v157
    %939 = vmatpush.msra.mxu0 %v155
    %940 = vmatmul.f32.gmra.mxu0 %v902
    %v941 = vpop.f32.mrf.mxu0
    %v942 = vadd.f32 0.0, %v941
    %943 = vdwg.mxu0
    %v944 = vadd.f32 %v109, %v922
    %v945 = vadd.f32 %v149, %v942
    %v946 = vxor.u32 %v944, 2147483648
    %v947 = vxor.u32 %v945, 2147483648
    %v948 = vmul.f32 %v946, 1.442695
    %v949 = vpow.pop %v948
    %v950 = vmul.f32 %v947, 1.442695
    %v951 = vpow.pop %v950
    %v952 = vadd.f32 %v949, 1.0
    %v953 = vadd.f32 %v951, 1.0
    %v954 = vrcp.pop %v952
    %v955 = vmul.f32 %v952, %v954
    %v956 = vsub.f32 1.0, %v955
    %v957 = vmul.f32 %v954, %v956
    %v958 = vadd.f32 %v954, %v957
    %vm959 = vweird.f32 %v952
    %vm960 = vweird.f32 %v954
    %vm961 = vmor %vm959, %vm960
    %v962 = vsel %vm961, %v954, %v958
    %v963 = vand.u32 2147483647, %v952
    %vm964 = vcmp.eq.f32.partialorder %v963, 8.507059e+37
    %v965 = vand.u32 %v952, 2147483648
    %v966 = vor.u32 1.1754944e-38, %v965
    %v967 = vsel %vm964, %v966, %v962
    %v968 = vmul.f32 1.0, %v967
    %v969 = vrcp.pop %v953
    %v970 = vmul.f32 %v953, %v969
    %v971 = vsub.f32 1.0, %v970
    %v972 = vmul.f32 %v969, %v971
    %v973 = vadd.f32 %v969, %v972
    %vm974 = vweird.f32 %v953
    %vm975 = vweird.f32 %v969
    %vm976 = vmor %vm974, %vm975
    %v977 = vsel %vm976, %v969, %v973
    %v978 = vand.u32 2147483647, %v953
    %vm979 = vcmp.eq.f32.partialorder %v978, 8.507059e+37
    %v980 = vand.u32 %v953, 2147483648
    %v981 = vor.u32 1.1754944e-38, %v980
    %v982 = vsel %vm979, %v981, %v977
    %v983 = vmul.f32 1.0, %v982
    %v984 = vmul.f32 %v968, 2.0
    %v985 = vsub.f32 %v984, 1.0
    %v986 = vmul.f32 %v968, %v866
    %988 = vrot.lane.b32.xlu0 %v985, 64
    %v989 = vpop.permute.xlu0 %988
    %v991 = vmul.f32 %v968, %v989
    %993 = vrot.lane.b32.xlu0 %v991, 32
    %v994 = vpop.permute.xlu0 %993
    %v996 = vadd.f32 %v986, %v994
    %v997 = vtanh.pop %v996
    %999 = vrot.lane.b32.xlu0 %v997, 64
    %v1000 = vpop.permute.xlu0 %999
    %v1002 = vmul.f32 %v968, %v1000
    %v1003 = vmul.f32 %v983, 2.0
    %v1004 = vsub.f32 %v1003, 1.0
    %v1005 = vmul.f32 %v983, %v885
    %1007 = vrot.lane.b32.xlu0 %v1004, 64
    %v1008 = vpop.permute.xlu0 %1007
    %v1010 = vmul.f32 %v983, %v1008
    %1012 = vrot.lane.b32.xlu0 %v1010, 32
    %v1013 = vpop.permute.xlu0 %1012
    %v1015 = vadd.f32 %v1005, %v1013
    %v1016 = vtanh.pop %v1015
    %1018 = vrot.lane.b32.xlu0 %v1016, 64
    %v1019 = vpop.permute.xlu0 %1018
    %v1021 = vmul.f32 %v983, %v1019
    %1023 = vrot.lane.b32.xlu0 %v1002, 32
    %v1024 = vpop.permute.xlu0 %1023
    %1027 = vrot.lane.b32.xlu0 %v1021, 64
    %v1028 = vpop.permute.xlu0 %1027
    %v1030 = vsel %vm245, %v1024, %v1028
    %v1032 = vsel %vm174, %v1030, 0
    %1034 = vmatpush.msra.mxu0 0.0
    %1035 = vmatpush.msra.mxu0 0.0
    %1036 = vmatpush.msra.mxu0 0.0
    %1037 = vmatpush.msra.mxu0 0.0
    %1038 = vmatpush.msra.mxu0 0.0
    %1039 = vmatpush.msra.mxu0 0.0
    %1040 = vmatpush.msra.mxu0 0.0
    %1041 = vmatpush.msra.mxu0 0.0
    %1042 = vmatpush.msra.mxu0 %v168
    %1043 = vmatpush.msra.mxu0 %v166
    %1044 = vmatpush.msra.mxu0 %v164
    %1045 = vmatpush.msra.mxu0 %v162
    %1046 = vmatpush.msra.mxu0 %v160
    %1047 = vmatpush.msra.mxu0 %v158
    %1048 = vmatpush.msra.mxu0 %v156
    %1049 = vmatpush.msra.mxu0 %v154
    %1050 = vmatmul.f32.gmra.mxu0 %v1032
    %v1051 = vpop.f32.mrf.mxu0
    %v1052 = vadd.f32 0.0, %v1051
    %1053 = vdwg.mxu0
    %1054 = vmatpush.msra.mxu0 0.0
    %1055 = vmatpush.msra.mxu0 0.0
    %1056 = vmatpush.msra.mxu0 0.0
    %1057 = vmatpush.msra.mxu0 0.0
    %1058 = vmatpush.msra.mxu0 0.0
    %1059 = vmatpush.msra.mxu0 0.0
    %1060 = vmatpush.msra.mxu0 0.0
    %1061 = vmatpush.msra.mxu0 0.0
    %1062 = vmatpush.msra.mxu0 %v169
    %1063 = vmatpush.msra.mxu0 %v167
    %1064 = vmatpush.msra.mxu0 %v165
    %1065 = vmatpush.msra.mxu0 %v163
    %1066 = vmatpush.msra.mxu0 %v161
    %1067 = vmatpush.msra.mxu0 %v159
    %1068 = vmatpush.msra.mxu0 %v157
    %1069 = vmatpush.msra.mxu0 %v155
    %1070 = vmatmul.f32.gmra.mxu0 %v1032
    %v1071 = vpop.f32.mrf.mxu0
    %v1072 = vadd.f32 0.0, %v1071
    %1073 = vdwg.mxu0
    %v1074 = vadd.f32 %v112, %v1052
    %v1075 = vadd.f32 %v152, %v1072
    %v1076 = vxor.u32 %v1074, 2147483648
    %v1077 = vxor.u32 %v1075, 2147483648
    %v1078 = vmul.f32 %v1076, 1.442695
    %v1079 = vpow.pop %v1078
    %v1080 = vmul.f32 %v1077, 1.442695
    %v1081 = vpow.pop %v1080
    %v1082 = vadd.f32 %v1079, 1.0
    %v1083 = vadd.f32 %v1081, 1.0
    %v1084 = vrcp.pop %v1082
    %v1085 = vmul.f32 %v1082, %v1084
    %v1086 = vsub.f32 1.0, %v1085
    %v1087 = vmul.f32 %v1084, %v1086
    %v1088 = vadd.f32 %v1084, %v1087
    %vm1089 = vweird.f32 %v1082
    %vm1090 = vweird.f32 %v1084
    %vm1091 = vmor %vm1089, %vm1090
    %v1092 = vsel %vm1091, %v1084, %v1088
    %v1093 = vand.u32 2147483647, %v1082
    %vm1094 = vcmp.eq.f32.partialorder %v1093, 8.507059e+37
    %v1095 = vand.u32 %v1082, 2147483648
    %v1096 = vor.u32 1.1754944e-38, %v1095
    %v1097 = vsel %vm1094, %v1096, %v1092
    %v1098 = vmul.f32 1.0, %v1097
    %v1099 = vrcp.pop %v1083
    %v1100 = vmul.f32 %v1083, %v1099
    %v1101 = vsub.f32 1.0, %v1100
    %v1102 = vmul.f32 %v1099, %v1101
    %v1103 = vadd.f32 %v1099, %v1102
    %vm1104 = vweird.f32 %v1083
    %vm1105 = vweird.f32 %v1099
    %vm1106 = vmor %vm1104, %vm1105
    %v1107 = vsel %vm1106, %v1099, %v1103
    %v1108 = vand.u32 2147483647, %v1083
    %vm1109 = vcmp.eq.f32.partialorder %v1108, 8.507059e+37
    %v1110 = vand.u32 %v1083, 2147483648
    %v1111 = vor.u32 1.1754944e-38, %v1110
    %v1112 = vsel %vm1109, %v1111, %v1107
    %v1113 = vmul.f32 1.0, %v1112
    %v1114 = vmul.f32 %v1098, 2.0
    %v1115 = vsub.f32 %v1114, 1.0
    %v1116 = vmul.f32 %v1098, %v996
    %1118 = vrot.lane.b32.xlu0 %v1115, 64
    %v1119 = vpop.permute.xlu0 %1118
    %v1121 = vmul.f32 %v1098, %v1119
    %1123 = vrot.lane.b32.xlu0 %v1121, 32
    %v1124 = vpop.permute.xlu0 %1123
    %v1126 = vadd.f32 %v1116, %v1124
    %v1127 = vtanh.pop %v1126
    %1129 = vrot.lane.b32.xlu0 %v1127, 64
    %v1130 = vpop.permute.xlu0 %1129
    %v1132 = vmul.f32 %v1098, %v1130
    %v1133 = vmul.f32 %v1113, 2.0
    %v1134 = vsub.f32 %v1133, 1.0
    %v1135 = vmul.f32 %v1113, %v1015
    %1137 = vrot.lane.b32.xlu0 %v1134, 64
    %v1138 = vpop.permute.xlu0 %1137
    %v1140 = vmul.f32 %v1113, %v1138
    %1142 = vrot.lane.b32.xlu0 %v1140, 32
    %v1143 = vpop.permute.xlu0 %1142
    %v1145 = vadd.f32 %v1135, %v1143
    %v1146 = vtanh.pop %v1145
    %1148 = vrot.lane.b32.xlu0 %v1146, 64
    %v1149 = vpop.permute.xlu0 %1148
    %v1151 = vmul.f32 %v1113, %v1149
    %1153 = vrot.lane.b32.xlu0 %v1132, 32
    %v1154 = vpop.permute.xlu0 %1153
    %1157 = vrot.lane.b32.xlu0 %v1151, 64
    %v1158 = vpop.permute.xlu0 %1157
    %v1160 = vsel %vm245, %v1154, %v1158
    %v1162 = vsel %vm174, %v1160, 0
    %1164 = vmatpush.msra.mxu0 0.0
    %1165 = vmatpush.msra.mxu0 0.0
    %1166 = vmatpush.msra.mxu0 0.0
    %1167 = vmatpush.msra.mxu0 0.0
    %1168 = vmatpush.msra.mxu0 0.0
    %1169 = vmatpush.msra.mxu0 0.0
    %1170 = vmatpush.msra.mxu0 0.0
    %1171 = vmatpush.msra.mxu0 0.0
    %1172 = vmatpush.msra.mxu0 %v169
    %1173 = vmatpush.msra.mxu0 %v167
    %1174 = vmatpush.msra.mxu0 %v165
    %1175 = vmatpush.msra.mxu0 %v163
    %1176 = vmatpush.msra.mxu0 %v161
    %1177 = vmatpush.msra.mxu0 %v159
    %1178 = vmatpush.msra.mxu0 %v157
    %1179 = vmatpush.msra.mxu0 %v155
    %1180 = vmatmul.f32.gmra.mxu0 %v1162
    %v1181 = vpop.f32.mrf.mxu0
    %v1182 = vadd.f32 0.0, %v1181
    %1183 = vdwg.mxu0
    %v1184 = vadd.f32 %v45, %v1182
    %v1185 = vxor.u32 %v1184, 2147483648
    %v1186 = vmul.f32 %v1185, 1.442695
    %v1187 = vpow.pop %v1186
    %v1188 = vadd.f32 %v1187, 1.0
    %v1189 = vrcp.pop %v1188
    %v1190 = vmul.f32 %v1188, %v1189
    %v1191 = vsub.f32 1.0, %v1190
    %v1192 = vmul.f32 %v1189, %v1191
    %v1193 = vadd.f32 %v1189, %v1192
    %vm1194 = vweird.f32 %v1188
    %vm1195 = vweird.f32 %v1189
    %vm1196 = vmor %vm1194, %vm1195
    %v1197 = vsel %vm1196, %v1189, %v1193
    %v1198 = vand.u32 2147483647, %v1188
    %vm1199 = vcmp.eq.f32.partialorder %v1198, 8.507059e+37
    %v1200 = vand.u32 %v1188, 2147483648
    %v1201 = vor.u32 1.1754944e-38, %v1200
    %v1202 = vsel %vm1199, %v1201, %v1197
    %v1203 = vmul.f32 1.0, %v1202
    %v1204 = vmul.f32 %v1203, 2.0
    %v1205 = vsub.f32 %v1204, 1.0
    %v1206 = vmul.f32 %v1203, %v1145
    %1208 = vrot.lane.b32.xlu0 %v1205, 64
    %v1209 = vpop.permute.xlu0 %1208
    %v1211 = vmul.f32 %v1203, %v1209
    %1213 = vrot.lane.b32.xlu0 %v1211, 32
    %v1214 = vpop.permute.xlu0 %1213
    %v1216 = vadd.f32 %v1206, %v1214
    %v1217 = vtanh.pop %v1216
    %1219 = vrot.lane.b32.xlu0 %v1217, 64
    %v1220 = vpop.permute.xlu0 %1219
    %v1222 = vmul.f32 %v1203, %v1220
    %v1223 = vld [vmem:[%s6] sm:$0xff]
    %v1224 = vld [vmem:[%s6 + $0x8] sm:$0xff]
    %v1225 = vld [vmem:[%s6 + $0x10] sm:$0xff]
    %v1226 = vld [vmem:[%s6 + $0x18] sm:$0xff]
    %v1227 = vld [vmem:[%s7] sm:$0x1]
    %v1229 = vperm.slane %v1227, 0
    %1232 = vrot.lane.b32.xlu0 %v1222, 32
    %v1233 = vpop.permute.xlu0 %1232
    %v1234 = vsel %vm245, %v1233, 0
    %1236 = vmatpush.msra.mxu0 0.0
    %1237 = vmatpush.msra.mxu0 0.0
    %1238 = vmatpush.msra.mxu0 0.0
    %1239 = vmatpush.msra.mxu0 0.0
    %1240 = vmatpush.msra.mxu0 0.0
    %1241 = vmatpush.msra.mxu0 0.0
    %1242 = vmatpush.msra.mxu0 0.0
    %1243 = vmatpush.msra.mxu0 0.0
    %1244 = vmatpush.msra.mxu0 0.0
    %1245 = vmatpush.msra.mxu0 0.0
    %1246 = vmatpush.msra.mxu0 0.0
    %1247 = vmatpush.msra.mxu0 0.0
    %1248 = vmatpush.msra.mxu0 %v1226
    %1249 = vmatpush.msra.mxu0 %v1225
    %1250 = vmatpush.msra.mxu0 %v1224
    %1251 = vmatpush.msra.mxu0 %v1223
    %1252 = vmatmul.f32.gmra.mxu0 %v1234
    %v1253 = vpop.f32.mrf.mxu0
    %v1254 = vadd.f32 %v1229, %v1253
    %1255 = vdwg.mxu0
    %v1256 = vxor.u32 %v1254, 2147483648
    %v1257 = vmul.f32 %v1256, 1.442695
    %v1258 = vpow.pop %v1257
    %v1259 = vadd.f32 %v1258, 1.0
    %v1260 = vrcp.pop %v1259
    %v1261 = vmul.f32 %v1259, %v1260
    %v1262 = vsub.f32 1.0, %v1261
    %v1263 = vmul.f32 %v1260, %v1262
    %v1264 = vadd.f32 %v1260, %v1263
    %vm1265 = vweird.f32 %v1259
    %vm1266 = vweird.f32 %v1260
    %vm1267 = vmor %vm1265, %vm1266
    %v1268 = vsel %vm1267, %v1260, %v1264
    %v1269 = vand.u32 2147483647, %v1259
    %vm1270 = vcmp.eq.f32.partialorder %v1269, 8.507059e+37
    %v1271 = vand.u32 %v1259, 2147483648
    %v1272 = vor.u32 1.1754944e-38, %v1271
    %v1273 = vsel %vm1270, %v1272, %v1268
    %v1274 = vmul.f32 1.0, %v1273
    %1275 = vst.msk [vmem:[#allocation2] sm:$0xff] %vm48, %v1274
    // Predicated region
    $region34: #{lstm_model_forward.1} parent=1 // pred_check
      _
    $region35: #{lstm_model_forward.1} parent=1 // pred_check_branch
      %1277 = sbr.rel (0) target = $region37
    $region36: #{lstm_model_forward.1} parent=1 // pred_region
      %1279 = vsyncadd [#allocation3], 0
      %s1281 = sshll.u32 [#allocation2], 4
      %s1282 = int_to_ptr.vmem [resolvable:$true] %s1281
      %s1283 = sshll.u32 %s8, 4
      %s1284 = int_to_ptr.hbm [resolvable:$true] %s1283
      %1286 = dma.vmem_to_hbm [thread:$0]  %s1282, 128, %s1284, [#allocation3]
    $region37: #{lstm_model_forward.1} parent=1 // pred_fallthru
      _
    // Predicated region
    $region38: #{lstm_model_forward.1} parent=1 // pred_check
      _
    $region39: #{lstm_model_forward.1} parent=1 // pred_check_branch
      %1288 = sbr.rel (0) target = $region41
    $region40: #{lstm_model_forward.1} parent=1 // pred_region
      %1290 = dma.done [#allocation3], 128
    $region41: #{lstm_model_forward.1} parent=1 // pred_fallthru
      _
    %1291 = vsyncpa [#allocation3], 1

</llo_original>
